<compile_context>
chip_gen: v7x
topology: tpu7x:2x2x1
jax: 0.10.0
libtpu: 0.0.40
codegen_flags: <defaults>
</compile_context>

<pallas_src>
import functools

import jax
import jax.numpy as jnp
from jax.experimental import pallas as pl
from jax.experimental.pallas import tpu as pltpu


# ----------------------------------------------------------------------------
# Small helpers
# ----------------------------------------------------------------------------
def _round_up(n, m):
    return ((n + m - 1) // m) * m


def _row_tiling(rows, max_block=512):
    """Row tile: multiple of 8, capped at max_block, >=2 grid blocks when rows allow it
    (so v7x's two TensorCores both get work)."""
    rows8 = _round_up(rows, 8)
    blk = min(max_block, max(8, _round_up((rows8 + 1) // 2, 8)))
    padded = _round_up(rows8, blk)
    return blk, padded


def _pad_rows(x, padded_rows):
    r = x.shape[0]
    if padded_rows == r:
        return x
    return jnp.pad(x, ((0, padded_rows - r),) + ((0, 0),) * (x.ndim - 1))


@functools.lru_cache(maxsize=None)
def _vmem_limit_bytes():
    # Per-generation VMEM budget: ~5/8 of physical capacity, leaving headroom for Mosaic
    # internal scratch (v7x only has 64 MiB; v5e/v6e have 128 MiB).
    try:
        cap = pltpu.get_tpu_info().vmem_capacity_bytes
    except Exception:
        cap = 64 * 1024 * 1024
    return int(min(max(cap * 5 // 8, 32 * 1024 * 1024), 100 * 1024 * 1024))


def _cp(dimension_semantics):
    return pltpu.CompilerParams(
        dimension_semantics=dimension_semantics,
        vmem_limit_bytes=_vmem_limit_bytes(),
    )


# ----------------------------------------------------------------------------
# Pallas kernels
# ----------------------------------------------------------------------------
def _in_layer_kernel(x_ref, w_ref, b_ref, o_ref):
    """in_layer Linear: (rows, 3*patch_size) @ (3*patch_size, d_model) + b. Row-tiled."""
    o_ref[...] = (
        jnp.dot(x_ref[...].astype(jnp.bfloat16), w_ref[...],
                preferred_element_type=jnp.float32)
        + b_ref[...]
    )


def _sim_kernel(xm_ref, keyn_ref, sim_ref):
    """Cosine similarity of mean embeddings vs (pre-normalised) prompt keys. f32, tiny."""
    xm = xm_ref[...]
    xn = xm * jax.lax.rsqrt(jnp.sum(xm * xm, axis=-1, keepdims=True) + 1e-12)
    # contract dim 1 of both operands -> no in-kernel transpose
    sim_ref[...] = jax.lax.dot_general(
        xn, keyn_ref[...],
        dimension_numbers=(((1,), (1,)), ((), ())),
        preferred_element_type=jnp.float32)


def _ln_linear_kernel(x_ref, g_ref, beta_ref, w_ref, b_ref, o_ref):
    """LinearEncoder backbone: LayerNorm(d_model) -> Linear(d_model, d_model). Row-tiled.
    LayerNorm statistics in f32; matmul operands in bf16 with f32 accumulation."""
    x = x_ref[...]
    mu = jnp.mean(x, axis=-1, keepdims=True)
    var = jnp.mean((x - mu) ** 2, axis=-1, keepdims=True)
    xn = (x - mu) * jax.lax.rsqrt(var + 1e-5)
    xn = xn * g_ref[...] + beta_ref[...]
    o_ref[...] = (
        jnp.dot(xn.astype(jnp.bfloat16), w_ref[...],
                preferred_element_type=jnp.float32)
        + b_ref[...]
    )


def _out_denorm_kernel(f0_ref, f1_ref, f2_ref, w_ref, b_ref, s_ref, m_ref, o_ref, acc_ref):
    """out_layer with the 3-channel sum folded in FRONT of the matmul:
         sum_c(feat_c @ W + b) == (sum_c feat_c) @ W + 3b
       tiled over BM rows ('parallel') and over the feature/contraction dim ('arbitrary')
       with a resident f32 VMEM accumulator; de-normalisation fused on the last step."""
    k = pl.program_id(1)

    @pl.when(k == 0)
    def _():
        acc_ref[...] = jnp.zeros_like(acc_ref)

    fs = f0_ref[...] + f1_ref[...] + f2_ref[...]          # channel fold (f32)
    acc_ref[...] += jnp.dot(fs.astype(jnp.bfloat16), w_ref[...],
                            preferred_element_type=jnp.float32)

    @pl.when(k == pl.num_programs(1) - 1)
    def _():
        o_ref[...] = (acc_ref[...] + 3.0 * b_ref[...]) * s_ref[...] + m_ref[...]


# ----------------------------------------------------------------------------
# Pallas wrappers
# ----------------------------------------------------------------------------
def pallas_in_layer(patches2d, in_w_bf16, in_b):
    r, kdim = patches2d.shape
    d = in_w_bf16.shape[1]
    blk, padded = _row_tiling(r)
    xp = _pad_rows(patches2d, padded)
    out = pl.pallas_call(
        _in_layer_kernel,
        out_shape=jax.ShapeDtypeStruct((padded, d), jnp.float32),
        grid=(padded // blk,),
        in_specs=[
            pl.BlockSpec((blk, kdim), lambda i: (i, 0)),
            pl.BlockSpec((kdim, d), lambda i: (0, 0)),
            pl.BlockSpec((1, d), lambda i: (0, 0)),
        ],
        out_specs=pl.BlockSpec((blk, d), lambda i: (i, 0)),
        compiler_params=_cp(("parallel",)),
    )(xp, in_w_bf16, in_b)
    return out[:r]


def pallas_sim(xm, key_norm):
    bm, d = xm.shape
    pool = key_norm.shape[0]
    return pl.pallas_call(
        _sim_kernel,
        out_shape=jax.ShapeDtypeStruct((bm, pool), jnp.float32),
        grid=(1,),
        in_specs=[pl.BlockSpec((bm, d), lambda i: (0, 0)),
                  pl.BlockSpec((pool, d), lambda i: (0, 0))],
        out_specs=pl.BlockSpec((bm, pool), lambda i: (0, 0)),
        compiler_params=_cp(("arbitrary",)),
    )(xm, key_norm)


def pallas_ln_linear(x, g, beta, w_bf16, b):
    rows, d = x.shape
    n = w_bf16.shape[1]
    blk, padded = _row_tiling(rows)
    xp = _pad_rows(x, padded)
    out = pl.pallas_call(
        _ln_linear_kernel,
        out_shape=jax.ShapeDtypeStruct((padded, n), jnp.float32),
        grid=(padded // blk,),
        in_specs=[
            pl.BlockSpec((blk, d), lambda i: (i, 0)),
            pl.BlockSpec((1, d), lambda i: (0, 0)),
            pl.BlockSpec((1, d), lambda i: (0, 0)),
            pl.BlockSpec((d, n), lambda i: (0, 0)),
            pl.BlockSpec((1, n), lambda i: (0, 0)),
        ],
        out_specs=pl.BlockSpec((blk, n), lambda i: (i, 0)),
        compiler_params=_cp(("parallel",)),
    )(xp, g, beta, w_bf16, b)
    return out[:rows]


def pallas_out_denorm(feat, out_w_bf16, out_b, stdev_bm, means_bm, pred_len):
    bm, f3 = feat.shape
    F, _ = out_w_bf16.shape
    assert f3 == 3 * F

    # pad feature dim per channel up to a 128 multiple (zero rows in W -> no effect)
    Fp = _round_up(F, 128)
    feat3 = feat.reshape(bm, 3, F)
    wp = out_w_bf16
    if Fp != F:
        feat3 = jnp.pad(feat3, ((0, 0), (0, 0), (0, Fp - F)))
        wp = jnp.pad(wp, ((0, Fp - F), (0, 0)))
    feat2 = feat3.reshape(bm, 3 * Fp)

    # lane-dense output: pad pred_len up to a 128 multiple (sliced away in the wrapper)
    plp = _round_up(max(pred_len, 1), 128)
    wp = jnp.pad(wp, ((0, 0), (0, plp - pred_len)))
    bp = jnp.pad(out_b, ((0, 0), (0, plp - pred_len)))

    # row tiling over BM ('parallel')
    bm_blk, bm_pad = _row_tiling(bm)
    featp = _pad_rows(feat2, bm_pad)
    sp = _pad_rows(stdev_bm, bm_pad)
    mp = _pad_rows(means_bm, bm_pad)

    # contraction tiling over Fp ('arbitrary') with a VMEM accumulator
    f_blk = Fp
    for cand in (2048, 1024, 512, 256, 128):
        if Fp % cand == 0 and Fp // cand >= 2:
            f_blk = cand
            break
    nk = Fp // f_blk

    out = pl.pallas_call(
        _out_denorm_kernel,
        out_shape=jax.ShapeDtypeStruct((bm_pad, plp), jnp.float32),
        grid=(bm_pad // bm_blk, nk),
        in_specs=[
            # same feature slab three times, offset to the three contiguous channel thirds
            pl.BlockSpec((bm_blk, f_blk), lambda i, k: (i, k)),
            pl.BlockSpec((bm_blk, f_blk), lambda i, k: (i, nk + k)),
            pl.BlockSpec((bm_blk, f_blk), lambda i, k: (i, 2 * nk + k)),
            pl.BlockSpec((f_blk, plp), lambda i, k: (k, 0)),
            pl.BlockSpec((1, plp), lambda i, k: (0, 0)),
            pl.BlockSpec((bm_blk, 1), lambda i, k: (i, 0)),
            pl.BlockSpec((bm_blk, 1), lambda i, k: (i, 0)),
        ],
        out_specs=pl.BlockSpec((bm_blk, plp), lambda i, k: (i, 0)),
        scratch_shapes=[pltpu.VMEM((bm_blk, plp), jnp.float32)],
        compiler_params=_cp(("parallel", "arbitrary")),
    )(featp, featp, featp, wp, bp, sp, mp)
    return out[:bm, :pred_len]


# ----------------------------------------------------------------------------
# Glue (reshapes / patching / top-k)
# ----------------------------------------------------------------------------
def patchify(x, patch_size, stride):
    """x: (BM, 3, L) -> (BM, patch_num, 3*patch_size).

    Mirrors ReplicationPad1d((0, stride)) + unfold(-1, patch_size, stride) +
    rearrange('b c n p -> b n (c p)')."""
    bm = x.shape[0]
    x_pad = jnp.concatenate([x, jnp.repeat(x[..., -1:], stride, axis=-1)], axis=-1)
    l_pad = x_pad.shape[-1]
    patch_num = (l_pad - patch_size) // stride + 1
    if stride == patch_size and l_pad == patch_num * patch_size:
        patches = x_pad.reshape(bm, 3, patch_num, patch_size)      # non-overlapping: pure reshape
    else:
        # TODO(synk): overlapping patches fall back to an XLA gather (outside Pallas).
        starts = jnp.arange(patch_num) * stride
        idx = starts[:, None] + jnp.arange(patch_size)[None, :]
        patches = x_pad[..., idx]                                  # (BM, 3, n, p)
    patches = jnp.transpose(patches, (0, 2, 1, 3))                 # (BM, n, 3, p)
    return patches.reshape(bm, patch_num, 3 * patch_size)


def init_params(key, patch_size, d_model, pool_size, out_in_features, pred_len):
    ks = jax.random.split(key, 5)
    s = 0.02
    return {
        "in_w": (jax.random.normal(ks[0], (3 * patch_size, d_model)) * s).astype(jnp.float32),
        "in_b": jnp.zeros((1, d_model), jnp.float32),
        "prompt_key": jax.random.uniform(ks[1], (pool_size, d_model), jnp.float32, -1.0, 1.0),
        "prompt": (jax.random.normal(ks[2], (pool_size, d_model)) * s).astype(jnp.float32),
        "ln_g": jnp.ones((1, d_model), jnp.float32),
        "ln_b": jnp.zeros((1, d_model), jnp.float32),
        "enc_w": (jax.random.normal(ks[3], (d_model, d_model)) * s).astype(jnp.float32),
        "enc_b": jnp.zeros((1, d_model), jnp.float32),
        "out_w": (jax.random.normal(ks[4], (out_in_features, pred_len)) * s).astype(jnp.float32),
        "out_b": jnp.zeros((1, pred_len), jnp.float32),
    }


@functools.partial(jax.jit, static_argnames=("patch_size", "stride", "top_k", "pred_len"))
def forecast(params, x, means, stdev, *, patch_size, stride, top_k, pred_len):
    """S2IPLLM.forecast with LLM='Linear' backbone.

    x:      (B, L, 3, M) float32;  means/stdev: (B, M) float32
    returns (dec_out (B, pred_len, M), res dict)
    """
    b, l, c, m = x.shape
    bm = b * m
    d_model = params["in_w"].shape[1]

    # bf16 weights (f32 accumulation inside the kernels)
    in_w = params["in_w"].astype(jnp.bfloat16)
    enc_w = params["enc_w"].astype(jnp.bfloat16)
    out_w = params["out_w"].astype(jnp.bfloat16)

    # rearrange 'b l c m -> (b m) c l'
    xr = jnp.transpose(x, (0, 3, 2, 1)).reshape(bm, c, l).astype(jnp.float32)

    # patching
    patches = patchify(xr, patch_size, stride)                    # (BM, N, 3*P)
    n_patch, kdim = patches.shape[1], patches.shape[2]

    # Kernel A: in_layer Linear (row-tiled, 'parallel')
    pre_rows = pallas_in_layer(patches.reshape(bm * n_patch, kdim), in_w, params["in_b"])
    pre = pre_rows.reshape(bm, n_patch, d_model)                  # (BM, N, D)

    # prompt pool: mean embedding over patches + cosine similarity vs l2-normalised keys
    xm = jnp.mean(pre, axis=1)                                    # (BM, D) tiny JAX reduce
    key = params["prompt_key"]
    key_norm = key * jax.lax.rsqrt(jnp.sum(key * key, axis=-1, keepdims=True) + 1e-12)
    similarity = pallas_sim(xm, key_norm)                         # (BM, pool)

    # top-k prompt selection (stays in JAX)
    top_vals, idx = jax.lax.top_k(similarity, top_k)
    reduce_sim = jnp.sum(top_vals) / bm
    batched_prompt = jnp.take(params["prompt"], idx, axis=0)      # (BM, top_k, D)
    prompted = jnp.concatenate([batched_prompt, pre], axis=1)     # (BM, N_tot, D)
    n_tot = prompted.shape[1]

    # Kernel B: LinearEncoder backbone = LayerNorm(d_model) -> Linear(d_model, d_model)
    last = pallas_ln_linear(prompted.reshape(bm * n_tot, d_model),
                            params["ln_g"], params["ln_b"], enc_w, params["enc_b"])

    # zero-copy row-major flatten: (BM*N_tot, D) -> (BM, N_tot*D) == (BM, 3*F)
    feat = last.reshape(bm, n_tot * d_model)

    # Kernel C: out_layer (channel-sum folded in) + de-normalisation
    out_bm = pallas_out_denorm(
        feat, out_w, params["out_b"],
        stdev.reshape(bm, 1).astype(jnp.float32),
        means.reshape(bm, 1).astype(jnp.float32),
        pred_len)                                                 # (BM, pred_len)

    # 'b m l -> b l m' in the wrapper so the kernel output stays lane-dense
    dec_out = jnp.transpose(out_bm.reshape(b, m, pred_len), (0, 2, 1))

    res = {"simlarity_loss": reduce_sim}
    return dec_out[:, -pred_len:, :], res


# ----------------------------------------------------------------------------
# Driver
# ----------------------------------------------------------------------------
if __name__ == "__main__":
    # small synthetic config
    B, L, C, M = 2, 16, 3, 4
    patch_size, stride = 4, 4
    d_model = 384                     # divisible by 3 (out_layer reshape) and by 128 (lane-dense)
    pool_size, top_k = 8, 3           # prompt pool size, prompt_length
    pred_len = 8
    patch_num = (L - patch_size) // stride + 1 + 1                # == 5
    n_tot = patch_num + top_k                                     # == 8
    assert (n_tot * d_model) % 3 == 0
    out_in_features = (n_tot * d_model) // 3                      # == 1024

    key = jax.random.PRNGKey(0)
    kx, kmean, kstd, kparam = jax.random.split(key, 4)
    x = jax.random.normal(kx, (B, L, C, M), jnp.float32)
    means = jax.random.normal(kmean, (B, M), jnp.float32)
    stdev = jax.random.uniform(kstd, (B, M), jnp.float32, 0.5, 1.5)

    params = init_params(kparam, patch_size, d_model, pool_size, out_in_features, pred_len)

    dec_out, res = forecast(
        params, x, means, stdev,
        patch_size=patch_size, stride=stride, top_k=top_k, pred_len=pred_len,
    )
    jax.block_until_ready((dec_out, res["simlarity_loss"]))

    assert dec_out.shape == (B, pred_len, M)
    assert bool(jnp.all(jnp.isfinite(dec_out)))
    assert bool(jnp.isfinite(res["simlarity_loss"]))
    print("KERNEL_OK")
</pallas_src>

<mosaic_0001>
module attributes {stable_mosaic.version = 11 : i64} {
  func.func @_in_layer_kernel(%arg0: i32, %arg1: memref<24x12xf32, #tpu.memory_space<vmem>>, %arg2: memref<12x384xbf16, #tpu.memory_space<vmem>>, %arg3: memref<1x384xf32, #tpu.memory_space<vmem>>, %arg4: memref<24x384xf32, #tpu.memory_space<vmem>>) attributes {dimension_semantics = [#tpu.dimension_semantics<parallel>], iteration_bounds = array<i64: 2>, scalar_prefetch = 0 : i64, scratch_operands = 0 : i64, tpu.core_type = #tpu.core_type<tc>, window_params = [{transform_indices = @transform_0, window_bounds = array<i64: 24, 12>}, {pipeline_mode = #tpu.pipeline_mode<synchronous>, transform_indices = @transform_1, window_bounds = array<i64: 12, 384>}, {pipeline_mode = #tpu.pipeline_mode<synchronous>, transform_indices = @transform_2, window_bounds = array<i64: 1, 384>}, {transform_indices = @transform_3, window_bounds = array<i64: 24, 384>}]} {
    %c0 = arith.constant 0 : index
    %c0_0 = arith.constant 0 : index
    %0 = vector.load %arg1[%c0, %c0_0] : memref<24x12xf32, #tpu.memory_space<vmem>>, vector<24x12xf32>
    %1 = arith.truncf %0 : vector<24x12xf32> to vector<24x12xbf16>
    %c0_1 = arith.constant 0 : index
    %c0_2 = arith.constant 0 : index
    %2 = vector.load %arg2[%c0_1, %c0_2] : memref<12x384xbf16, #tpu.memory_space<vmem>>, vector<12x384xbf16>
    %cst = arith.constant dense<0.000000e+00> : vector<24x384xf32>
    %3 = tpu.matmul %1, %2, %cst {dimension_numbers = #tpu.dot_dimension_numbers<[1], [0], [0], [1], [0, 0, 1, 1], [], []>} : vector<24x12xbf16>, vector<12x384xbf16>, vector<24x384xf32> -> vector<24x384xf32>
    %c0_3 = arith.constant 0 : index
    %c0_4 = arith.constant 0 : index
    %4 = vector.load %arg3[%c0_3, %c0_4] : memref<1x384xf32, #tpu.memory_space<vmem>>, vector<1x384xf32>
    %5 = vector.broadcast %4 : vector<1x384xf32> to vector<24x384xf32>
    %6 = arith.addf %3, %5 : vector<24x384xf32>
    %c0_5 = arith.constant 0 : index
    %c0_6 = arith.constant 0 : index
    %7 = vector.load %arg4[%c0_5, %c0_6] : memref<24x384xf32, #tpu.memory_space<vmem>>, vector<24x384xf32>
    tpu.vector_store %arg4[%c0_5, %c0_6], %6 {strides = array<i32>} : memref<24x384xf32, #tpu.memory_space<vmem>>, vector<24x384xf32>,
    return
  }
  func.func @transform_0(%arg0: i32) -> (i32, i32) {
    %c0_i32 = arith.constant 0 : i32
    %c0_i32_0 = arith.constant 0 : i32
    return %arg0, %c0_i32 : i32, i32
  }
  func.func @transform_1(%arg0: i32) -> (i32, i32) {
    %c0_i32 = arith.constant 0 : i32
    %c0_i32_0 = arith.constant 0 : i32
    %c0_i32_1 = arith.constant 0 : i32
    return %c0_i32, %c0_i32_0 : i32, i32
  }
  func.func @transform_2(%arg0: i32) -> (i32, i32) {
    %c0_i32 = arith.constant 0 : i32
    %c0_i32_0 = arith.constant 0 : i32
    %c0_i32_1 = arith.constant 0 : i32
    return %c0_i32, %c0_i32_0 : i32, i32
  }
  func.func @transform_3(%arg0: i32) -> (i32, i32) {
    %c0_i32 = arith.constant 0 : i32
    %c0_i32_0 = arith.constant 0 : i32
    return %arg0, %c0_i32 : i32, i32
  }
}

module attributes {stable_mosaic.version = 11 : i64} {
  func.func @_sim_kernel(%arg0: i32, %arg1: memref<8x384xf32, #tpu.memory_space<vmem>>, %arg2: memref<8x384xf32, #tpu.memory_space<vmem>>, %arg3: memref<8x8xf32, #tpu.memory_space<vmem>>) attributes {dimension_semantics = [#tpu.dimension_semantics<arbitrary>], iteration_bounds = array<i64: 1>, scalar_prefetch = 0 : i64, scratch_operands = 0 : i64, tpu.core_type = #tpu.core_type<tc>, window_params = [{pipeline_mode = #tpu.pipeline_mode<synchronous>, transform_indices = @transform_0, window_bounds = array<i64: 8, 384>}, {pipeline_mode = #tpu.pipeline_mode<synchronous>, transform_indices = @transform_1, window_bounds = array<i64: 8, 384>}, {pipeline_mode = #tpu.pipeline_mode<synchronous>, transform_indices = @transform_2, window_bounds = array<i64: 8, 8>}]} {
    %c0 = arith.constant 0 : index
    %c0_0 = arith.constant 0 : index
    %0 = vector.load %arg1[%c0, %c0_0] : memref<8x384xf32, #tpu.memory_space<vmem>>, vector<8x384xf32>
    %1 = arith.mulf %0, %0 : vector<8x384xf32>
    %cst = arith.constant dense<0.000000e+00> : vector<8xf32>
    %2 = vector.multi_reduction <add>, %1, %cst [1] : vector<8x384xf32> to vector<8xf32>
    %3 = vector.shape_cast %2 : vector<8xf32> to vector<8x1xf32>
    %cst_1 = arith.constant 9.99999996E-13 : f32
    %4 = vector.broadcast %cst_1 : f32 to vector<8x1xf32>
    %5 = arith.addf %3, %4 : vector<8x1xf32>
    %6 = math.rsqrt %5 : vector<8x1xf32>
    %7 = vector.broadcast %6 : vector<8x1xf32> to vector<8x384xf32>
    %8 = arith.mulf %0, %7 : vector<8x384xf32>
    %c0_2 = arith.constant 0 : index
    %c0_3 = arith.constant 0 : index
    %9 = vector.load %arg2[%c0_2, %c0_3] : memref<8x384xf32, #tpu.memory_space<vmem>>, vector<8x384xf32>
    %cst_4 = arith.constant dense<0.000000e+00> : vector<8x8xf32>
    %10 = tpu.matmul %8, %9, %cst_4 {dimension_numbers = #tpu.dot_dimension_numbers<[1], [1], [0], [0], [0, 0, 1, 0], [], []>} : vector<8x384xf32>, vector<8x384xf32>, vector<8x8xf32> -> vector<8x8xf32>
    %c0_5 = arith.constant 0 : index
    %c0_6 = arith.constant 0 : index
    %11 = vector.load %arg3[%c0_5, %c0_6] : memref<8x8xf32, #tpu.memory_space<vmem>>, vector<8x8xf32>
    tpu.vector_store %arg3[%c0_5, %c0_6], %10 {strides = array<i32>} : memref<8x8xf32, #tpu.memory_space<vmem>>, vector<8x8xf32>,
    return
  }
  func.func @transform_0(%arg0: i32) -> (i32, i32) {
    %c0_i32 = arith.constant 0 : i32
    %c0_i32_0 = arith.constant 0 : i32
    %c0_i32_1 = arith.constant 0 : i32
    return %c0_i32, %c0_i32_0 : i32, i32
  }
  func.func @transform_1(%arg0: i32) -> (i32, i32) {
    %c0_i32 = arith.constant 0 : i32
    %c0_i32_0 = arith.constant 0 : i32
    %c0_i32_1 = arith.constant 0 : i32
    return %c0_i32, %c0_i32_0 : i32, i32
  }
  func.func @transform_2(%arg0: i32) -> (i32, i32) {
    %c0_i32 = arith.constant 0 : i32
    %c0_i32_0 = arith.constant 0 : i32
    %c0_i32_1 = arith.constant 0 : i32
    return %c0_i32, %c0_i32_0 : i32, i32
  }
}

module attributes {stable_mosaic.version = 11 : i64} {
  func.func @_ln_linear_kernel(%arg0: i32, %arg1: memref<32x384xf32, #tpu.memory_space<vmem>>, %arg2: memref<1x384xf32, #tpu.memory_space<vmem>>, %arg3: memref<1x384xf32, #tpu.memory_space<vmem>>, %arg4: memref<384x384xbf16, #tpu.memory_space<vmem>>, %arg5: memref<1x384xf32, #tpu.memory_space<vmem>>, %arg6: memref<32x384xf32, #tpu.memory_space<vmem>>) attributes {dimension_semantics = [#tpu.dimension_semantics<parallel>], iteration_bounds = array<i64: 2>, scalar_prefetch = 0 : i64, scratch_operands = 0 : i64, tpu.core_type = #tpu.core_type<tc>, window_params = [{transform_indices = @transform_0, window_bounds = array<i64: 32, 384>}, {pipeline_mode = #tpu.pipeline_mode<synchronous>, transform_indices = @transform_1, window_bounds = array<i64: 1, 384>}, {pipeline_mode = #tpu.pipeline_mode<synchronous>, transform_indices = @transform_2, window_bounds = array<i64: 1, 384>}, {pipeline_mode = #tpu.pipeline_mode<synchronous>, transform_indices = @transform_3, window_bounds = array<i64: 384, 384>}, {pipeline_mode = #tpu.pipeline_mode<synchronous>, transform_indices = @transform_4, window_bounds = array<i64: 1, 384>}, {transform_indices = @transform_5, window_bounds = array<i64: 32, 384>}]} {
    %c0 = arith.constant 0 : index
    %c0_0 = arith.constant 0 : index
    %0 = vector.load %arg1[%c0, %c0_0] : memref<32x384xf32, #tpu.memory_space<vmem>>, vector<32x384xf32>
    %cst = arith.constant dense<0.000000e+00> : vector<32xf32>
    %1 = vector.multi_reduction <add>, %0, %cst [1] : vector<32x384xf32> to vector<32xf32>
    %2 = vector.shape_cast %1 : vector<32xf32> to vector<32x1xf32>
    %cst_1 = arith.constant 3.840000e+02 : f32
    %3 = vector.broadcast %cst_1 : f32 to vector<32x1xf32>
    %4 = arith.divf %2, %3 : vector<32x1xf32>
    %5 = vector.broadcast %4 : vector<32x1xf32> to vector<32x384xf32>
    %6 = arith.subf %0, %5 : vector<32x384xf32>
    %7 = arith.mulf %6, %6 : vector<32x384xf32>
    %cst_2 = arith.constant dense<0.000000e+00> : vector<32xf32>
    %8 = vector.multi_reduction <add>, %7, %cst_2 [1] : vector<32x384xf32> to vector<32xf32>
    %9 = vector.shape_cast %8 : vector<32xf32> to vector<32x1xf32>
    %cst_3 = arith.constant 3.840000e+02 : f32
    %10 = vector.broadcast %cst_3 : f32 to vector<32x1xf32>
    %11 = arith.divf %9, %10 : vector<32x1xf32>
    %12 = vector.broadcast %4 : vector<32x1xf32> to vector<32x384xf32>
    %13 = arith.subf %0, %12 : vector<32x384xf32>
    %cst_4 = arith.constant 9.99999974E-6 : f32
    %14 = vector.broadcast %cst_4 : f32 to vector<32x1xf32>
    %15 = arith.addf %11, %14 : vector<32x1xf32>
    %16 = math.rsqrt %15 : vector<32x1xf32>
    %17 = vector.broadcast %16 : vector<32x1xf32> to vector<32x384xf32>
    %18 = arith.mulf %13, %17 : vector<32x384xf32>
    %c0_5 = arith.constant 0 : index
    %c0_6 = arith.constant 0 : index
    %19 = vector.load %arg2[%c0_5, %c0_6] : memref<1x384xf32, #tpu.memory_space<vmem>>, vector<1x384xf32>
    %20 = vector.broadcast %19 : vector<1x384xf32> to vector<32x384xf32>
    %21 = arith.mulf %18, %20 : vector<32x384xf32>
    %c0_7 = arith.constant 0 : index
    %c0_8 = arith.constant 0 : index
    %22 = vector.load %arg3[%c0_7, %c0_8] : memref<1x384xf32, #tpu.memory_space<vmem>>, vector<1x384xf32>
    %23 = vector.broadcast %22 : vector<1x384xf32> to vector<32x384xf32>
    %24 = arith.addf %21, %23 : vector<32x384xf32>
    %25 = arith.truncf %24 : vector<32x384xf32> to vector<32x384xbf16>
    %c0_9 = arith.constant 0 : index
    %c0_10 = arith.constant 0 : index
    %26 = vector.load %arg4[%c0_9, %c0_10] : memref<384x384xbf16, #tpu.memory_space<vmem>>, vector<384x384xbf16>
    %cst_11 = arith.constant dense<0.000000e+00> : vector<32x384xf32>
    %27 = tpu.matmul %25, %26, %cst_11 {dimension_numbers = #tpu.dot_dimension_numbers<[1], [0], [0], [1], [0, 0, 1, 1], [], []>} : vector<32x384xbf16>, vector<384x384xbf16>, vector<32x384xf32> -> vector<32x384xf32>
    %c0_12 = arith.constant 0 : index
    %c0_13 = arith.constant 0 : index
    %28 = vector.load %arg5[%c0_12, %c0_13] : memref<1x384xf32, #tpu.memory_space<vmem>>, vector<1x384xf32>
    %29 = vector.broadcast %28 : vector<1x384xf32> to vector<32x384xf32>
    %30 = arith.addf %27, %29 : vector<32x384xf32>
    %c0_14 = arith.constant 0 : index
    %c0_15 = arith.constant 0 : index
    %31 = vector.load %arg6[%c0_14, %c0_15] : memref<32x384xf32, #tpu.memory_space<vmem>>, vector<32x384xf32>
    tpu.vector_store %arg6[%c0_14, %c0_15], %30 {strides = array<i32>} : memref<32x384xf32, #tpu.memory_space<vmem>>, vector<32x384xf32>,
    return
  }
  func.func @transform_0(%arg0: i32) -> (i32, i32) {
    %c0_i32 = arith.constant 0 : i32
    %c0_i32_0 = arith.constant 0 : i32
    return %arg0, %c0_i32 : i32, i32
  }
  func.func @transform_1(%arg0: i32) -> (i32, i32) {
    %c0_i32 = arith.constant 0 : i32
    %c0_i32_0 = arith.constant 0 : i32
    %c0_i32_1 = arith.constant 0 : i32
    return %c0_i32, %c0_i32_0 : i32, i32
  }
  func.func @transform_2(%arg0: i32) -> (i32, i32) {
    %c0_i32 = arith.constant 0 : i32
    %c0_i32_0 = arith.constant 0 : i32
    %c0_i32_1 = arith.constant 0 : i32
    return %c0_i32, %c0_i32_0 : i32, i32
  }
  func.func @transform_3(%arg0: i32) -> (i32, i32) {
    %c0_i32 = arith.constant 0 : i32
    %c0_i32_0 = arith.constant 0 : i32
    %c0_i32_1 = arith.constant 0 : i32
    return %c0_i32, %c0_i32_0 : i32, i32
  }
  func.func @transform_4(%arg0: i32) -> (i32, i32) {
    %c0_i32 = arith.constant 0 : i32
    %c0_i32_0 = arith.constant 0 : i32
    %c0_i32_1 = arith.constant 0 : i32
    return %c0_i32, %c0_i32_0 : i32, i32
  }
  func.func @transform_5(%arg0: i32) -> (i32, i32) {
    %c0_i32 = arith.constant 0 : i32
    %c0_i32_0 = arith.constant 0 : i32
    return %arg0, %c0_i32 : i32, i32
  }
}

module attributes {stable_mosaic.version = 11 : i64} {
  func.func @_out_denorm_kernel(%arg0: i32, %arg1: i32, %arg2: memref<8x512xf32, #tpu.memory_space<vmem>>, %arg3: memref<8x512xf32, #tpu.memory_space<vmem>>, %arg4: memref<8x512xf32, #tpu.memory_space<vmem>>, %arg5: memref<512x128xbf16, #tpu.memory_space<vmem>>, %arg6: memref<1x128xf32, #tpu.memory_space<vmem>>, %arg7: memref<8x1xf32, #tpu.memory_space<vmem>>, %arg8: memref<8x1xf32, #tpu.memory_space<vmem>>, %arg9: memref<8x128xf32, #tpu.memory_space<vmem>>, %arg10: memref<8x128xf32, #tpu.memory_space<vmem>>) attributes {dimension_semantics = [#tpu.dimension_semantics<parallel>, #tpu.dimension_semantics<arbitrary>], iteration_bounds = array<i64: 1, 2>, scalar_prefetch = 0 : i64, scratch_operands = 1 : i64, tpu.core_type = #tpu.core_type<tc>, window_params = [{transform_indices = @transform_0, window_bounds = array<i64: 8, 512>}, {transform_indices = @transform_1, window_bounds = array<i64: 8, 512>}, {transform_indices = @transform_2, window_bounds = array<i64: 8, 512>}, {transform_indices = @transform_3, window_bounds = array<i64: 512, 128>}, {pipeline_mode = #tpu.pipeline_mode<synchronous>, transform_indices = @transform_4, window_bounds = array<i64: 1, 128>}, {transform_indices = @transform_5, window_bounds = array<i64: 8, 1>}, {transform_indices = @transform_6, window_bounds = array<i64: 8, 1>}, {transform_indices = @transform_7, window_bounds = array<i64: 8, 128>}]} {
    %c0_i32 = arith.constant 0 : i32
    %0 = arith.cmpi eq, %arg1, %c0_i32 : i32
    %1 = arith.extui %0 : i1 to i32
    %c0_i32_0 = arith.constant 0 : i32
    %2 = arith.cmpi ne, %1, %c0_i32_0 : i32
    scf.if %2 {
      %cst_13 = arith.constant 0.000000e+00 : f32
      %17 = vector.broadcast %cst_13 : f32 to vector<8x128xf32>
      %c0_14 = arith.constant 0 : index
      %c0_15 = arith.constant 0 : index
      %18 = vector.load %arg10[%c0_14, %c0_15] : memref<8x128xf32, #tpu.memory_space<vmem>>, vector<8x128xf32>
      tpu.vector_store %arg10[%c0_14, %c0_15], %17 {strides = array<i32>} : memref<8x128xf32, #tpu.memory_space<vmem>>, vector<8x128xf32>,
    } else {
    }
    %c0 = arith.constant 0 : index
    %c0_1 = arith.constant 0 : index
    %3 = vector.load %arg2[%c0, %c0_1] : memref<8x512xf32, #tpu.memory_space<vmem>>, vector<8x512xf32>
    %c0_2 = arith.constant 0 : index
    %c0_3 = arith.constant 0 : index
    %4 = vector.load %arg3[%c0_2, %c0_3] : memref<8x512xf32, #tpu.memory_space<vmem>>, vector<8x512xf32>
    %5 = arith.addf %3, %4 : vector<8x512xf32>
    %c0_4 = arith.constant 0 : index
    %c0_5 = arith.constant 0 : index
    %6 = vector.load %arg4[%c0_4, %c0_5] : memref<8x512xf32, #tpu.memory_space<vmem>>, vector<8x512xf32>
    %7 = arith.addf %5, %6 : vector<8x512xf32>
    %c0_6 = arith.constant 0 : index
    %c0_7 = arith.constant 0 : index
    %8 = vector.load %arg10[%c0_6, %c0_7] : memref<8x128xf32, #tpu.memory_space<vmem>>, vector<8x128xf32>
    %9 = arith.truncf %7 : vector<8x512xf32> to vector<8x512xbf16>
    %c0_8 = arith.constant 0 : index
    %c0_9 = arith.constant 0 : index
    %10 = vector.load %arg5[%c0_8, %c0_9] : memref<512x128xbf16, #tpu.memory_space<vmem>>, vector<512x128xbf16>
    %cst = arith.constant dense<0.000000e+00> : vector<8x128xf32>
    %11 = tpu.matmul %9, %10, %cst {dimension_numbers = #tpu.dot_dimension_numbers<[1], [0], [0], [1], [0, 0, 1, 1], [], []>} : vector<8x512xbf16>, vector<512x128xbf16>, vector<8x128xf32> -> vector<8x128xf32>
    %12 = arith.addf %8, %11 : vector<8x128xf32>
    %c0_10 = arith.constant 0 : index
    %c0_11 = arith.constant 0 : index
    %13 = vector.load %arg10[%c0_10, %c0_11] : memref<8x128xf32, #tpu.memory_space<vmem>>, vector<8x128xf32>
    tpu.vector_store %arg10[%c0_10, %c0_11], %12 {strides = array<i32>} : memref<8x128xf32, #tpu.memory_space<vmem>>, vector<8x128xf32>,
    %c1_i32 = arith.constant 1 : i32
    %14 = arith.cmpi eq, %arg1, %c1_i32 : i32
    %15 = arith.extui %14 : i1 to i32
    %c0_i32_12 = arith.constant 0 : i32
    %16 = arith.cmpi ne, %15, %c0_i32_12 : i32
    scf.if %16 {
      %c0_13 = arith.constant 0 : index
      %c0_14 = arith.constant 0 : index
      %17 = vector.load %arg10[%c0_13, %c0_14] : memref<8x128xf32, #tpu.memory_space<vmem>>, vector<8x128xf32>
      %c0_15 = arith.constant 0 : index
      %c0_16 = arith.constant 0 : index
      %18 = vector.load %arg6[%c0_15, %c0_16] : memref<1x128xf32, #tpu.memory_space<vmem>>, vector<1x128xf32>
      %cst_17 = arith.constant 3.000000e+00 : f32
      %19 = vector.broadcast %cst_17 : f32 to vector<1x128xf32>
      %20 = arith.mulf %19, %18 : vector<1x128xf32>
      %21 = vector.broadcast %20 : vector<1x128xf32> to vector<8x128xf32>
      %22 = arith.addf %17, %21 : vector<8x128xf32>
      %c0_18 = arith.constant 0 : index
      %c0_19 = arith.constant 0 : index
      %23 = vector.load %arg7[%c0_18, %c0_19] : memref<8x1xf32, #tpu.memory_space<vmem>>, vector<8x1xf32>
      %24 = vector.broadcast %23 : vector<8x1xf32> to vector<8x128xf32>
      %25 = arith.mulf %22, %24 : vector<8x128xf32>
      %c0_20 = arith.constant 0 : index
      %c0_21 = arith.constant 0 : index
      %26 = vector.load %arg8[%c0_20, %c0_21] : memref<8x1xf32, #tpu.memory_space<vmem>>, vector<8x1xf32>
      %27 = vector.broadcast %26 : vector<8x1xf32> to vector<8x128xf32>
      %28 = arith.addf %25, %27 : vector<8x128xf32>
      %c0_22 = arith.constant 0 : index
      %c0_23 = arith.constant 0 : index
      %29 = vector.load %arg9[%c0_22, %c0_23] : memref<8x128xf32, #tpu.memory_space<vmem>>, vector<8x128xf32>
      tpu.vector_store %arg9[%c0_22, %c0_23], %28 {strides = array<i32>} : memref<8x128xf32, #tpu.memory_space<vmem>>, vector<8x128xf32>,
    } else {
    }
    return
  }
  func.func @transform_0(%arg0: i32, %arg1: i32) -> (i32, i32) {
    %c0_i32 = arith.constant 0 : i32
    return %arg0, %arg1 : i32, i32
  }
  func.func @transform_1(%arg0: i32, %arg1: i32) -> (i32, i32) {
    %c2_i32 = arith.constant 2 : i32
    %0 = arith.addi %c2_i32, %arg1 : i32
    %c0_i32 = arith.constant 0 : i32
    return %arg0, %0 : i32, i32
  }
  func.func @transform_2(%arg0: i32, %arg1: i32) -> (i32, i32) {
    %c4_i32 = arith.constant 4 : i32
    %0 = arith.addi %c4_i32, %arg1 : i32
    %c0_i32 = arith.constant 0 : i32
    return %arg0, %0 : i32, i32
  }
  func.func @transform_3(%arg0: i32, %arg1: i32) -> (i32, i32) {
    %c0_i32 = arith.constant 0 : i32
    %c0_i32_0 = arith.constant 0 : i32
    return %arg1, %c0_i32 : i32, i32
  }
  func.func @transform_4(%arg0: i32, %arg1: i32) -> (i32, i32) {
    %c0_i32 = arith.constant 0 : i32
    %c0_i32_0 = arith.constant 0 : i32
    %c0_i32_1 = arith.constant 0 : i32
    return %c0_i32, %c0_i32_0 : i32, i32
  }
  func.func @transform_5(%arg0: i32, %arg1: i32) -> (i32, i32) {
    %c0_i32 = arith.constant 0 : i32
    %c0_i32_0 = arith.constant 0 : i32
    return %arg0, %c0_i32 : i32, i32
  }
  func.func @transform_6(%arg0: i32, %arg1: i32) -> (i32, i32) {
    %c0_i32 = arith.constant 0 : i32
    %c0_i32_0 = arith.constant 0 : i32
    return %arg0, %c0_i32 : i32, i32
  }
  func.func @transform_7(%arg0: i32, %arg1: i32) -> (i32, i32) {
    %c0_i32 = arith.constant 0 : i32
    %c0_i32_0 = arith.constant 0 : i32
    return %arg0, %c0_i32 : i32, i32
  }
}

</mosaic_0001>

<llo_original>
// kernel: forecast.4
$region0: #{forecast.4}
  #allocation0 [shape = 'u32[]', space=smem, size = 0x4, offset = 0x4, fixed_abs, tag = 'smem constant byte address 0x4 - core index']
  #allocation1 [shape = 'u32[144,128]{1,0:T(1,128)}', space=vmem, size = 0x12000, scoped, tag = 'internal scratch']
  %s0 = inlined_call_operand.vmem [shape: f32[48,12], index: 0, kind: input, shape index: {}]
  %s1 = inlined_call_operand.vmem [shape: bf16[12,384], index: 1, kind: input, shape index: {}]
  %s2 = inlined_call_operand.vmem [shape: f32[1,384], index: 2, kind: input, shape index: {}]
  %s3 = inlined_call_operand.vmem [shape: f32[48,384], index: 3, kind: output, shape index: {}]
  %s4 = sld [smem:[#allocation0]]
  $region45: #{forecast.4} parent=0
    _
  %s6 = ssub.s32 1, %s4
  %s7 = scalar_select 0, %s6, %s4
  loop: start=0, step=1, limit=4
  $region2: #{forecast.4} parent=0 // loop_pre_header
    _
  $region3: #{forecast.4} parent=0 // loop_header
    %s9 = sphi 0, %s13
    %p10 = scmp.ge.s32.totalorder %s9, 4
    %s19 = sphi 0, %s21
    %s22 = sphi 0, %s19
    %s23 = sphi 0, %s22
    %s39 = sphi 0, %s23
    %s43 = sphi 0, %s43
    %s45 = sphi 0, %s43
    %s46 = sphi 0, %s45
    %s60 = sphi 0, %s46
    %s64 = sphi 0, %s64
    %s66 = sphi 0, %s64
    %s67 = sphi 0, %s66
    %s81 = sphi 0, %s67
    %s87 = sphi 0, %s89
    %s90 = sphi 0, %s87
    %s91 = sphi 0, %s90
    %s107 = sphi 0, %s91
  $region4: #{forecast.4} parent=0 // loop_header_branch
    %12 = sbr.rel (%p10) target = $region8
  $region5: #{forecast.4} parent=0 // loop_body
    %s14 = ssub.s32 %s9, 1
    %s15 = ssub.s32 %s9, 2
    %s16 = sadd.s32 %s9, 1
    %s17 = ssub.s32 %s9, %s16
    %p18 = scmp.eq.s32.totalorder %s17, 0
    %s20 = sadd.s32 %s19, 1
    %s21 = scalar_select %p18, %s19, %s20
    %p24 = pneg %p18
    %p25 = scmp.eq.s32.totalorder %s9, 1
    %p26 = por %p24, %p25
    %p27 = scmp.ne.s32.totalorder %s19, %s22
    %p28 = scmp.eq.s32.totalorder %s9, 0
    %p29 = por %p27, %p28
    %p30 = scmp.ne.s32.totalorder %s19, %s22
    %p31 = scmp.eq.s32.totalorder %s14, 1
    %p32 = por %p30, %p31
    %p33 = scmp.ne.s32.totalorder %s22, %s23
    %p34 = scmp.eq.s32.totalorder %s14, 0
    %p35 = por %p33, %p34
    %p36 = scmp.ne.s32.totalorder %s22, %s23
    %p37 = scmp.eq.s32.totalorder %s15, 1
    %p38 = por %p36, %p37
    %p40 = scmp.ne.s32.totalorder %s23, %s39
    %p41 = scmp.eq.s32.totalorder %s15, 0
    %p42 = por %p40, %p41
    %s44 = sadd.s32 %s43, 1
    %p47 = scmp.eq.s32.totalorder %s9, 1
    %p48 = scmp.ne.s32.totalorder %s43, %s45
    %p49 = scmp.eq.s32.totalorder %s9, 0
    %p50 = por %p48, %p49
    %p51 = scmp.ne.s32.totalorder %s43, %s45
    %p52 = scmp.eq.s32.totalorder %s14, 1
    %p53 = por %p51, %p52
    %p54 = scmp.ne.s32.totalorder %s45, %s46
    %p55 = scmp.eq.s32.totalorder %s14, 0
    %p56 = por %p54, %p55
    %p57 = scmp.ne.s32.totalorder %s45, %s46
    %p58 = scmp.eq.s32.totalorder %s15, 1
    %p59 = por %p57, %p58
    %p61 = scmp.ne.s32.totalorder %s46, %s60
    %p62 = scmp.eq.s32.totalorder %s15, 0
    %p63 = por %p61, %p62
    %s65 = sadd.s32 %s64, 1
    %p68 = scmp.eq.s32.totalorder %s9, 1
    %p69 = scmp.ne.s32.totalorder %s64, %s66
    %p70 = scmp.eq.s32.totalorder %s9, 0
    %p71 = por %p69, %p70
    %p72 = scmp.ne.s32.totalorder %s64, %s66
    %p73 = scmp.eq.s32.totalorder %s14, 1
    %p74 = por %p72, %p73
    %p75 = scmp.ne.s32.totalorder %s66, %s67
    %p76 = scmp.eq.s32.totalorder %s14, 0
    %p77 = por %p75, %p76
    %p78 = scmp.ne.s32.totalorder %s66, %s67
    %p79 = scmp.eq.s32.totalorder %s15, 1
    %p80 = por %p78, %p79
    %p82 = scmp.ne.s32.totalorder %s67, %s81
    %p83 = scmp.eq.s32.totalorder %s15, 0
    %p84 = por %p82, %p83
    %s85 = ssub.s32 %s9, %s16
    %p86 = scmp.eq.s32.totalorder %s85, 0
    %s88 = sadd.s32 %s87, 1
    %s89 = scalar_select %p86, %s87, %s88
    %p92 = pneg %p86
    %p93 = scmp.eq.s32.totalorder %s9, 1
    %p94 = por %p92, %p93
    %p95 = scmp.ne.s32.totalorder %s87, %s90
    %p96 = scmp.eq.s32.totalorder %s9, 0
    %p97 = por %p95, %p96
    %p98 = scmp.ne.s32.totalorder %s87, %s90
    %p99 = scmp.eq.s32.totalorder %s14, 1
    %p100 = por %p98, %p99
    %p101 = scmp.ne.s32.totalorder %s90, %s91
    %p102 = scmp.eq.s32.totalorder %s14, 0
    %p103 = por %p101, %p102
    %p104 = scmp.ne.s32.totalorder %s90, %s91
    %p105 = scmp.eq.s32.totalorder %s15, 1
    %p106 = por %p104, %p105
    %p108 = scmp.ne.s32.totalorder %s91, %s107
    %p109 = scmp.eq.s32.totalorder %s15, 0
    %p110 = por %p108, %p109
    %p111 = scmp.le.s32.totalorder 1, %s9
    %p112 = scmp.lt.s32.totalorder %s9, 3
    %p113 = pnand %p111, %p112
    %p114 = pneg %p113
    // Predicated region
    $region9: #{forecast.4} parent=5 // pred_check
      _
    $region10: #{forecast.4} parent=5 // pred_check_branch
      %116 = sbr.rel (%p113) target = $region12
    $region11: #{forecast.4} parent=5 // pred_region
      %s117 = ssub.s32 %s9, 1
      // Predicated region
      $region13: #{forecast.4} parent=11 // pred_check
        %p118 = pneg %p56
      $region14: #{forecast.4} parent=11 // pred_check_branch
        %120 = sbr.rel (%p118) target = $region16
      $region15: #{forecast.4} parent=11 // pred_region
        _
      $region16: #{forecast.4} parent=11 // pred_fallthru
        _
      // Predicated region
      $region17: #{forecast.4} parent=11 // pred_check
        %p121 = pneg %p77
      $region18: #{forecast.4} parent=11 // pred_check_branch
        %123 = sbr.rel (%p121) target = $region20
      $region19: #{forecast.4} parent=11 // pred_region
        _
      $region20: #{forecast.4} parent=11 // pred_fallthru
        _
    $region12: #{forecast.4} parent=5 // pred_fallthru
      _
    %p124 = scmp.lt.s32.totalorder %s9, 2
    // Predicated region
    $region21: #{forecast.4} parent=5 // pred_check
      %p125 = pneg %p124
    $region22: #{forecast.4} parent=5 // pred_check_branch
      %127 = sbr.rel (%p125) target = $region24
    $region23: #{forecast.4} parent=5 // pred_region
      // Predicated region
      $region25: #{forecast.4} parent=23 // pred_check
        %p128 = pneg %p29
      $region26: #{forecast.4} parent=23 // pred_check_branch
        %130 = sbr.rel (%p128) target = $region28
      $region27: #{forecast.4} parent=23 // pred_region
        %s131 = smul.u32 3, %s9
        %p132 = scmp.lt.s32.totalorder %s131, 5
        %s133 = scalar_select %p132, %s131, 5
        %s134 = smul.addr %s133, 8
        %s135 = scalar_lea.vmem %s0, %s134
        %s136 = smul.u32 3, %s9
      $region28: #{forecast.4} parent=23 // pred_fallthru
        _
    $region24: #{forecast.4} parent=5 // pred_fallthru
      _
    %p137 = scmp.le.s32.totalorder 1, %s9
    %p138 = scmp.lt.s32.totalorder %s9, 3
    %p139 = pnand %p137, %p138
    %p140 = pneg %p139
    // Predicated region
    $region29: #{forecast.4} parent=5 // pred_check
      _
    $region30: #{forecast.4} parent=5 // pred_check_branch
      %142 = sbr.rel (%p139) target = $region32
    $region31: #{forecast.4} parent=5 // pred_region
      %s143 = ssub.s32 %s9, 1
      %s144 = smul.u32 3, %s14
      %p145 = scmp.lt.s32.totalorder %s144, 5
      %s146 = scalar_select %p145, %s144, 5
      %s147 = smul.addr %s146, 8
      %s148 = scalar_lea.vmem %s0, %s147
      %p149 = pneg %p35
      %p150 = pneg %p32
      %p151 = pneg %p56
      %p152 = pneg %p53
      %p153 = pneg %p77
      %p154 = pneg %p74
      %p155 = pneg %p103
      %p156 = pneg %p100
      %s157 = smul.u32 3, %s14
      %p158 = scmp.lt.s32.totalorder %s157, 5
      %s159 = scalar_select %p158, %s157, 5
      %s160 = smul.addr %s159, 3
      %s161 = smul.addr %s160, 8
      %s162 = scalar_lea.vmem %s3, %s161
      %s163 = smul.u32 3, %s14
      %p164 = scmp.lt.s32.totalorder %s163, 5
      %s165 = scalar_select %p164, %s163, 5
      %s166 = smul.addr %s165, 8
      %s167 = scalar_lea.vmem %s0, %s166
      %s168 = smul.u32 3, %s14
      %s169 = smul.u32 3, %s14
      %p170 = scmp.lt.s32.totalorder %s169, 5
      %s171 = scalar_select %p170, %s169, 5
      %s172 = smul.addr %s171, 3
      %s173 = smul.addr %s172, 8
      %s174 = scalar_lea.vmem %s3, %s173
      %s175 = smul.u32 3, %s14
      %v177 = vld [vmem:[%s167] sm:$0xff]
      %v178 = vld [vmem:[%s167 + $0x8] sm:$0xff]
      %v179 = vld [vmem:[%s167 + $0x10] sm:$0xff]
      %v180 = vpack.c.bf16 %v178, %v177
      %v181 = vpack.c.bf16 %v179, %v179
      %v182 = vld [vmem:[%s1] sm:$0xff]
      %v183 = vld [vmem:[%s1 + $0x8] sm:$0xf]
      %v184 = vld [vmem:[%s1 + $0xc] sm:$0x33]
      %v185 = vld [vmem:[%s1 + $0x14] sm:$0x3]
      %v186 = vld [vmem:[%s2] sm:$0x7]
      %v188 = vlaneseq
      %v189 = vshrl.u32 %v188, 7
      %v190 = vsub.s32 0, %v189
      %v191 = vrot.slane %v186, %v190
      %v192 = vlaneseq
      %v193 = vshrl.u32 %v192, 7
      %v194 = vsub.s32 1, %v193
      %v195 = vrot.slane %v186, %v194
      %v196 = vlaneseq
      %v197 = vshrl.u32 %v196, 7
      %v198 = vsub.s32 2, %v197
      %v199 = vrot.slane %v186, %v198
      %v207 = vunpack.c.l.b16 %v182
      %v208 = vunpack.c.h.b16 %v182
      %v209 = vunpack.c.l.b16 %v183
      %v210 = vunpack.c.l.b16 %v184
      %v211 = vunpack.c.h.b16 %v184
      %v212 = vunpack.c.l.b16 %v185
      %v213 = vpack.c.b16 %v210, %v207
      %v214 = vpack.c.b16 %v211, %v208
      %v215 = vpack.c.b16 %v212, %v209
      %vm216 = vcmask 97280
      %v218 = vsel %vm216, %v180, 0
      %v221 = vsel %vm216, %v181, 0
      %vm223 = vcmask 1045504
      %v225 = vsel %vm223, %v213, 0
      %v228 = vsel %vm223, %v214, 0
      %v231 = vsel %vm223, %v215, 0
      %233 = vmatprep.subr.bf16.mxu0 %v228
      %234 = vmatpush1.bf16.msra.mxu0 %v225
      %235 = vmatprep.subr.bf16.mxu0 0
      %236 = vmatpush1.bf16.msra.mxu0 0
      %237 = vmatprep.subr.bf16.mxu0 0
      %238 = vmatpush1.bf16.msra.mxu0 0
      %239 = vmatprep.subr.bf16.mxu0 0
      %240 = vmatpush1.bf16.msra.mxu0 0
      %241 = vmatprep.subr.bf16.mxu0 0
      %242 = vmatpush1.bf16.msra.mxu0 0
      %243 = vmatprep.subr.bf16.mxu0 0
      %244 = vmatpush1.bf16.msra.mxu0 0
      %245 = vmatprep.subr.bf16.mxu0 0
      %246 = vmatpush1.bf16.msra.mxu0 0
      %247 = vmatprep.subr.bf16.mxu0 0
      %248 = vmatpush1.bf16.msra.mxu0 0
      %249 = vmatprep.subr.bf16.mxu0 0
      %250 = vmatpush1.bf16.msra.mxu0 0
      %251 = vmatprep.subr.bf16.mxu0 0
      %252 = vmatpush1.bf16.msra.mxu0 0
      %253 = vmatprep.subr.bf16.mxu0 0
      %254 = vmatpush1.bf16.msra.mxu0 0
      %255 = vmatprep.subr.bf16.mxu0 0
      %256 = vmatpush1.bf16.msra.mxu0 0
      %257 = vmatprep.subr.bf16.mxu0 0
      %258 = vmatpush1.bf16.msra.mxu0 0
      %259 = vmatprep.subr.bf16.mxu0 0
      %260 = vmatpush1.bf16.msra.mxu0 0
      %261 = vmatprep.subr.bf16.mxu0 0
      %262 = vmatpush1.bf16.msra.mxu0 0
      %263 = vmatprep.subr.bf16.mxu0 0
      %264 = vmatpush1.bf16.msra.mxu0 0
      %265 = vmatprep.mubr.bf16.mxu0 0
      %266 = vmatmul.mubr.bf16.gmra.mrb[0].mxu0 %v218
      %v267 = vpop.f32.mrb[0].mxu0
      %v268 = vadd.f32 %v191, %v267
      %v269 = vpop.f32.mrb[0].mxu0
      %v270 = vadd.f32 %v195, %v269
      %v271 = vpop.f32.mrb[0].mxu0
      %v272 = vadd.f32 %v191, %v271
      %v273 = vpop.f32.mrb[0].mxu0
      %v274 = vadd.f32 %v195, %v273
      %275 = vmatprep.mubr.bf16.mxu0 0
      %276 = vmatmul.mubr.bf16.gmra.mrb[0].mxu0 %v221
      %v277 = vpop.f32.mrb[0].mxu0
      %v278 = vadd.f32 %v191, %v277
      %v279 = vpop.f32.mrb[0].mxu0
      %v280 = vadd.f32 %v195, %v279
      %v281 = vpop.f32.mrb[0].mxu0
      %v282 = vpop.f32.mrb[0].mxu0
      %283 = vdwg.mxu0
      %284 = vmatprep.subr.bf16.mxu0 0
      %285 = vmatpush1.bf16.msra.mxu0 %v231
      %286 = vmatprep.subr.bf16.mxu0 0
      %287 = vmatpush1.bf16.msra.mxu0 0
      %288 = vmatprep.subr.bf16.mxu0 0
      %289 = vmatpush1.bf16.msra.mxu0 0
      %290 = vmatprep.subr.bf16.mxu0 0
      %291 = vmatpush1.bf16.msra.mxu0 0
      %292 = vmatprep.subr.bf16.mxu0 0
      %293 = vmatpush1.bf16.msra.mxu0 0
      %294 = vmatprep.subr.bf16.mxu0 0
      %295 = vmatpush1.bf16.msra.mxu0 0
      %296 = vmatprep.subr.bf16.mxu0 0
      %297 = vmatpush1.bf16.msra.mxu0 0
      %298 = vmatprep.subr.bf16.mxu0 0
      %299 = vmatpush1.bf16.msra.mxu0 0
      %300 = vmatprep.subr.bf16.mxu0 0
      %301 = vmatpush1.bf16.msra.mxu0 0
      %302 = vmatprep.subr.bf16.mxu0 0
      %303 = vmatpush1.bf16.msra.mxu0 0
      %304 = vmatprep.subr.bf16.mxu0 0
      %305 = vmatpush1.bf16.msra.mxu0 0
      %306 = vmatprep.subr.bf16.mxu0 0
      %307 = vmatpush1.bf16.msra.mxu0 0
      %308 = vmatprep.subr.bf16.mxu0 0
      %309 = vmatpush1.bf16.msra.mxu0 0
      %310 = vmatprep.subr.bf16.mxu0 0
      %311 = vmatpush1.bf16.msra.mxu0 0
      %312 = vmatprep.subr.bf16.mxu0 0
      %313 = vmatpush1.bf16.msra.mxu0 0
      %314 = vmatprep.subr.bf16.mxu0 0
      %315 = vmatpush1.bf16.msra.mxu0 0
      %316 = vmatprep.mubr.bf16.mxu0 0
      %317 = vmatmul.mubr.bf16.gmra.mrb[0].mxu0 %v218
      %v318 = vpop.f32.mrb[0].mxu0
      %v319 = vadd.f32 %v199, %v318
      %v320 = vpop.f32.mrb[0].mxu0
      %v321 = vpop.f32.mrb[0].mxu0
      %v322 = vadd.f32 %v199, %v321
      %v323 = vpop.f32.mrb[0].mxu0
      %324 = vmatprep.mubr.bf16.mxu0 0
      %325 = vmatmul.mubr.bf16.gmra.mrb[0].mxu0 %v221
      %v326 = vpop.f32.mrb[0].mxu0
      %v327 = vadd.f32 %v199, %v326
      %v328 = vpop.f32.mrb[0].mxu0
      %v329 = vpop.f32.mrb[0].mxu0
      %v330 = vpop.f32.mrb[0].mxu0
      %331 = vdwg.mxu0
      %332 = vst [vmem:[%s174] sm:$0xff] %v268
      %333 = vst [vmem:[%s174 + $0x8] sm:$0xff] %v270
      %334 = vst [vmem:[%s174 + $0x10] sm:$0xff] %v319
      %335 = vst [vmem:[%s174 + $0x18] sm:$0xff] %v272
      %336 = vst [vmem:[%s174 + $0x20] sm:$0xff] %v274
      %337 = vst [vmem:[%s174 + $0x28] sm:$0xff] %v322
      %338 = vst [vmem:[%s174 + $0x30] sm:$0xff] %v278
      %339 = vst [vmem:[%s174 + $0x38] sm:$0xff] %v280
      %340 = vst [vmem:[%s174 + $0x40] sm:$0xff] %v327
      %s341 = smul.u32 3, %s14
      %p342 = scmp.lt.s32.totalorder %s341, 5
      %s343 = scalar_select %p342, %s341, 5
      %s344 = smul.addr %s343, 3
      %s345 = smul.addr %s344, 8
      %s346 = scalar_lea.vmem %s3, %s345
      // Predicated region
      $region33: #{forecast.4} parent=31 // pred_check
        %p347 = pneg %p100
      $region34: #{forecast.4} parent=31 // pred_check_branch
        %349 = sbr.rel (%p347) target = $region36
      $region35: #{forecast.4} parent=31 // pred_region
        %s350 = smul.u32 3, %s14
      $region36: #{forecast.4} parent=31 // pred_fallthru
        _
    $region32: #{forecast.4} parent=5 // pred_fallthru
      _
    %p351 = scmp.le.s32.totalorder 2, %s9
    // Predicated region
    $region37: #{forecast.4} parent=5 // pred_check
      %p352 = pneg %p351
    $region38: #{forecast.4} parent=5 // pred_check_branch
      %354 = sbr.rel (%p352) target = $region40
    $region39: #{forecast.4} parent=5 // pred_region
      %s355 = ssub.s32 %s9, 2
      // Predicated region
      $region41: #{forecast.4} parent=39 // pred_check
        %p356 = pneg %p106
      $region42: #{forecast.4} parent=39 // pred_check_branch
        %358 = sbr.rel (%p356) target = $region44
      $region43: #{forecast.4} parent=39 // pred_region
        %s359 = smul.u32 3, %s15
        %p360 = scmp.lt.s32.totalorder %s359, 5
        %s361 = scalar_select %p360, %s359, 5
        %s362 = smul.addr %s361, 3
        %s363 = smul.addr %s362, 8
        %s364 = scalar_lea.vmem %s3, %s363
      $region44: #{forecast.4} parent=39 // pred_fallthru
        _
    $region40: #{forecast.4} parent=5 // pred_fallthru
      _
  $region6: #{forecast.4} parent=0 // loop_footer
    %s13 = sadd.s32 1, %s9
  $region7: #{forecast.4} parent=0 // loop_footer_branch
    %8 = sbr.rel target = $region3
  $region8: #{forecast.4} parent=0 // loop_exit
    _

// kernel: forecast.5
$region0: #{forecast.5}
  #allocation0 [shape = 'u32[]', space=smem, size = 0x4, offset = 0x4, fixed_abs, tag = 'smem constant byte address 0x4 - core index']
  #allocation1 [shape = 'u32[144,128]{1,0:T(1,128)}', space=vmem, size = 0x12000, scoped, tag = 'internal scratch']
  %s0 = inlined_call_operand.vmem [shape: f32[8,384], index: 0, kind: input, shape index: {}]
  %s1 = inlined_call_operand.vmem [shape: f32[8,384], index: 1, kind: input, shape index: {}]
  %s2 = inlined_call_operand.vmem [shape: f32[8,8], index: 2, kind: output, shape index: {}]
  %s3 = sld [smem:[#allocation0]]
  $region18: #{forecast.5} parent=0
    _
  %s5 = ssub.s32 1, %s3
  %s6 = scalar_select 0, %s5, %s3
  // Predicated region
  $region2: #{forecast.5} parent=0 // pred_check
    _
  $region3: #{forecast.5} parent=0 // pred_check_branch
    %8 = sbr.rel (0) target = $region5
  $region4: #{forecast.5} parent=0 // pred_region
    _
  $region5: #{forecast.5} parent=0 // pred_fallthru
    _
  // Predicated region
  $region6: #{forecast.5} parent=0 // pred_check
    _
  $region7: #{forecast.5} parent=0 // pred_check_branch
    %10 = sbr.rel (0) target = $region9
  $region8: #{forecast.5} parent=0 // pred_region
    _
  $region9: #{forecast.5} parent=0 // pred_fallthru
    _
  %v11 = vld [vmem:[%s0] sm:$0xff]
  %v12 = vld [vmem:[%s0 + $0x8] sm:$0xff]
  %v13 = vld [vmem:[%s0 + $0x10] sm:$0xff]
  %v14 = vmul.f32 %v11, %v11
  %v15 = vmul.f32 %v12, %v12
  %v16 = vmul.f32 %v13, %v13
  %v17 = vadd.f32 %v14, %v15
  %v18 = vadd.f32 %v17, %v16
  %19 = vadd.xlane.f32.xlu0 %v18
  %v20 = vpop.xlane.xlu0 %19
  %v21 = vadd.f32 %v20, 1e-12
  %v22 = vrsqrt.pop %v21
  %v23 = vmul.f32 %v11, %v22
  %v24 = vmul.f32 %v12, %v22
  %v25 = vmul.f32 %v13, %v22
  %v26 = vld [vmem:[%s1] sm:$0xff]
  %v27 = vld [vmem:[%s1 + $0x8] sm:$0xff]
  %v28 = vld [vmem:[%s1 + $0x10] sm:$0xff]
  %29 = vmatprep.subr.mxu0 %v27
  %30 = vmatpush1.xpose.msra.mxu0 %v26
  %31 = vmatprep.subr.mxu0 0.0
  %32 = vmatpush1.xpose.msra.mxu0 0.0
  %33 = vmatprep.subr.mxu0 0.0
  %34 = vmatpush1.xpose.msra.mxu0 0.0
  %35 = vmatprep.subr.mxu0 0.0
  %36 = vmatpush1.xpose.msra.mxu0 0.0
  %37 = vmatprep.subr.mxu0 0.0
  %38 = vmatpush1.xpose.msra.mxu0 0.0
  %39 = vmatprep.subr.mxu0 0.0
  %40 = vmatpush1.xpose.msra.mxu0 0.0
  %41 = vmatprep.subr.mxu0 0.0
  %42 = vmatpush1.xpose.msra.mxu0 0.0
  %43 = vmatprep.subr.mxu0 0.0
  %44 = vmatpush1.xpose.msra.mxu0 0.0
  %45 = vmatprep.subr.mxu0 0.0
  %46 = vmatpush1.xpose.msra.mxu0 0.0
  %47 = vmatprep.subr.mxu0 0.0
  %48 = vmatpush1.xpose.msra.mxu0 0.0
  %49 = vmatprep.subr.mxu0 0.0
  %50 = vmatpush1.xpose.msra.mxu0 0.0
  %51 = vmatprep.subr.mxu0 0.0
  %52 = vmatpush1.xpose.msra.mxu0 0.0
  %53 = vmatprep.subr.mxu0 0.0
  %54 = vmatpush1.xpose.msra.mxu0 0.0
  %55 = vmatprep.subr.mxu0 0.0
  %56 = vmatpush1.xpose.msra.mxu0 0.0
  %57 = vmatprep.subr.mxu0 0.0
  %58 = vmatpush1.xpose.msra.mxu0 0.0
  %59 = vmatprep.subr.mxu0 0.0
  %60 = vmatpush1.xpose.msra.mxu0 0.0
  %61 = vmatprep.subr.mxu0 0.0
  %62 = vmatpush1.xpose.msra.mxu0 0.0
  %63 = vmatprep.subr.mxu0 0.0
  %64 = vmatpush1.xpose.msra.mxu0 0.0
  %65 = vmatprep.subr.mxu0 0.0
  %66 = vmatpush1.xpose.msra.mxu0 0.0
  %67 = vmatprep.subr.mxu0 0.0
  %68 = vmatpush1.xpose.msra.mxu0 0.0
  %69 = vmatprep.subr.mxu0 0.0
  %70 = vmatpush1.xpose.msra.mxu0 0.0
  %71 = vmatprep.subr.mxu0 0.0
  %72 = vmatpush1.xpose.msra.mxu0 0.0
  %73 = vmatprep.subr.mxu0 0.0
  %74 = vmatpush1.xpose.msra.mxu0 0.0
  %75 = vmatprep.subr.mxu0 0.0
  %76 = vmatpush1.xpose.msra.mxu0 0.0
  %77 = vmatprep.subr.mxu0 0.0
  %78 = vmatpush1.xpose.msra.mxu0 0.0
  %79 = vmatprep.subr.mxu0 0.0
  %80 = vmatpush1.xpose.msra.mxu0 0.0
  %81 = vmatprep.subr.mxu0 0.0
  %82 = vmatpush1.xpose.msra.mxu0 0.0
  %83 = vmatprep.subr.mxu0 0.0
  %84 = vmatpush1.xpose.msra.mxu0 0.0
  %85 = vmatprep.subr.mxu0 0.0
  %86 = vmatpush1.xpose.msra.mxu0 0.0
  %87 = vmatprep.subr.mxu0 0.0
  %88 = vmatpush1.xpose.msra.mxu0 0.0
  %89 = vmatprep.subr.mxu0 0.0
  %90 = vmatpush1.xpose.msra.mxu0 0.0
  %91 = vmatprep.subr.mxu0 0.0
  %92 = vmatpush1.xpose.msra.mxu0 0.0
  %93 = vmatprep.mubr.f32.mxu0 %v24
  %94 = vmatmul.mubr.f32.gmra.mrb[0].mxu0 %v23
  %v95 = vpop.f32.mrb[0].mxu0
  %v96 = vadd.f32 0.0, %v95
  %v97 = vpop.f32.mrb[0].mxu0
  %98 = vdwg.mxu0
  %99 = vmatprep.subr.mxu0 0.0
  %100 = vmatpush1.xpose.msra.mxu0 %v28
  %101 = vmatprep.subr.mxu0 0.0
  %102 = vmatpush1.xpose.msra.mxu0 0.0
  %103 = vmatprep.subr.mxu0 0.0
  %104 = vmatpush1.xpose.msra.mxu0 0.0
  %105 = vmatprep.subr.mxu0 0.0
  %106 = vmatpush1.xpose.msra.mxu0 0.0
  %107 = vmatprep.subr.mxu0 0.0
  %108 = vmatpush1.xpose.msra.mxu0 0.0
  %109 = vmatprep.subr.mxu0 0.0
  %110 = vmatpush1.xpose.msra.mxu0 0.0
  %111 = vmatprep.subr.mxu0 0.0
  %112 = vmatpush1.xpose.msra.mxu0 0.0
  %113 = vmatprep.subr.mxu0 0.0
  %114 = vmatpush1.xpose.msra.mxu0 0.0
  %115 = vmatprep.subr.mxu0 0.0
  %116 = vmatpush1.xpose.msra.mxu0 0.0
  %117 = vmatprep.subr.mxu0 0.0
  %118 = vmatpush1.xpose.msra.mxu0 0.0
  %119 = vmatprep.subr.mxu0 0.0
  %120 = vmatpush1.xpose.msra.mxu0 0.0
  %121 = vmatprep.subr.mxu0 0.0
  %122 = vmatpush1.xpose.msra.mxu0 0.0
  %123 = vmatprep.subr.mxu0 0.0
  %124 = vmatpush1.xpose.msra.mxu0 0.0
  %125 = vmatprep.subr.mxu0 0.0
  %126 = vmatpush1.xpose.msra.mxu0 0.0
  %127 = vmatprep.subr.mxu0 0.0
  %128 = vmatpush1.xpose.msra.mxu0 0.0
  %129 = vmatprep.subr.mxu0 0.0
  %130 = vmatpush1.xpose.msra.mxu0 0.0
  %131 = vmatprep.subr.mxu0 0.0
  %132 = vmatpush1.xpose.msra.mxu0 0.0
  %133 = vmatprep.subr.mxu0 0.0
  %134 = vmatpush1.xpose.msra.mxu0 0.0
  %135 = vmatprep.subr.mxu0 0.0
  %136 = vmatpush1.xpose.msra.mxu0 0.0
  %137 = vmatprep.subr.mxu0 0.0
  %138 = vmatpush1.xpose.msra.mxu0 0.0
  %139 = vmatprep.subr.mxu0 0.0
  %140 = vmatpush1.xpose.msra.mxu0 0.0
  %141 = vmatprep.subr.mxu0 0.0
  %142 = vmatpush1.xpose.msra.mxu0 0.0
  %143 = vmatprep.subr.mxu0 0.0
  %144 = vmatpush1.xpose.msra.mxu0 0.0
  %145 = vmatprep.subr.mxu0 0.0
  %146 = vmatpush1.xpose.msra.mxu0 0.0
  %147 = vmatprep.subr.mxu0 0.0
  %148 = vmatpush1.xpose.msra.mxu0 0.0
  %149 = vmatprep.subr.mxu0 0.0
  %150 = vmatpush1.xpose.msra.mxu0 0.0
  %151 = vmatprep.subr.mxu0 0.0
  %152 = vmatpush1.xpose.msra.mxu0 0.0
  %153 = vmatprep.subr.mxu0 0.0
  %154 = vmatpush1.xpose.msra.mxu0 0.0
  %155 = vmatprep.subr.mxu0 0.0
  %156 = vmatpush1.xpose.msra.mxu0 0.0
  %157 = vmatprep.subr.mxu0 0.0
  %158 = vmatpush1.xpose.msra.mxu0 0.0
  %159 = vmatprep.subr.mxu0 0.0
  %160 = vmatpush1.xpose.msra.mxu0 0.0
  %161 = vmatprep.subr.mxu0 0.0
  %162 = vmatpush1.xpose.msra.mxu0 0.0
  %163 = vmatprep.mubr.f32.mxu0 0.0
  %164 = vmatmul.mubr.f32.gmra.mrb[0].mxu0 %v25
  %v165 = vpop.f32.mrb[0].mxu0
  %v166 = vadd.f32 %v96, %v165
  %v167 = vpop.f32.mrb[0].mxu0
  %168 = vdwg.mxu0
  %vm169 = vcmask 64512
  %170 = vst.msk [vmem:[%s2] sm:$0xff] %vm169, %v166
  // Predicated region
  $region10: #{forecast.5} parent=0 // pred_check
    _
  $region11: #{forecast.5} parent=0 // pred_check_branch
    %172 = sbr.rel (0) target = $region13
  $region12: #{forecast.5} parent=0 // pred_region
    _
  $region13: #{forecast.5} parent=0 // pred_fallthru
    _
  // Predicated region
  $region14: #{forecast.5} parent=0 // pred_check
    _
  $region15: #{forecast.5} parent=0 // pred_check_branch
    %174 = sbr.rel (0) target = $region17
  $region16: #{forecast.5} parent=0 // pred_region
    _
  $region17: #{forecast.5} parent=0 // pred_fallthru
    _

// kernel: forecast.6
$region0: #{forecast.6}
  #allocation0 [shape = 'u32[]', space=smem, size = 0x4, offset = 0x4, fixed_abs, tag = 'smem constant byte address 0x4 - core index']
  #allocation1 [shape = 'u32[144,128]{1,0:T(1,128)}', space=vmem, size = 0x12000, scoped, tag = 'internal scratch']
  %s0 = inlined_call_operand.vmem [shape: f32[64,384], index: 0, kind: input, shape index: {}]
  %s1 = inlined_call_operand.vmem [shape: f32[1,384], index: 1, kind: input, shape index: {}]
  %s2 = inlined_call_operand.vmem [shape: f32[1,384], index: 2, kind: input, shape index: {}]
  %s3 = inlined_call_operand.vmem [shape: bf16[384,384], index: 3, kind: input, shape index: {}]
  %s4 = inlined_call_operand.vmem [shape: f32[1,384], index: 4, kind: input, shape index: {}]
  %s5 = inlined_call_operand.vmem [shape: f32[64,384], index: 5, kind: output, shape index: {}]
  %s6 = sld [smem:[#allocation0]]
  $region53: #{forecast.6} parent=0
    _
  %s8 = ssub.s32 1, %s6
  %s9 = scalar_select 0, %s8, %s6
  loop: start=0, step=1, limit=4
  $region2: #{forecast.6} parent=0 // loop_pre_header
    _
  $region3: #{forecast.6} parent=0 // loop_header
    %s11 = sphi 0, %s15
    %p12 = scmp.ge.s32.totalorder %s11, 4
    %s21 = sphi 0, %s23
    %s24 = sphi 0, %s21
    %s25 = sphi 0, %s24
    %s41 = sphi 0, %s25
    %s45 = sphi 0, %s45
    %s47 = sphi 0, %s45
    %s48 = sphi 0, %s47
    %s62 = sphi 0, %s48
    %s66 = sphi 0, %s66
    %s68 = sphi 0, %s66
    %s69 = sphi 0, %s68
    %s83 = sphi 0, %s69
    %s87 = sphi 0, %s87
    %s89 = sphi 0, %s87
    %s90 = sphi 0, %s89
    %s104 = sphi 0, %s90
    %s108 = sphi 0, %s108
    %s110 = sphi 0, %s108
    %s111 = sphi 0, %s110
    %s125 = sphi 0, %s111
    %s131 = sphi 0, %s133
    %s134 = sphi 0, %s131
    %s135 = sphi 0, %s134
    %s151 = sphi 0, %s135
  $region4: #{forecast.6} parent=0 // loop_header_branch
    %14 = sbr.rel (%p12) target = $region8
  $region5: #{forecast.6} parent=0 // loop_body
    %s16 = ssub.s32 %s11, 1
    %s17 = ssub.s32 %s11, 2
    %s18 = sadd.s32 %s11, 1
    %s19 = ssub.s32 %s11, %s18
    %p20 = scmp.eq.s32.totalorder %s19, 0
    %s22 = sadd.s32 %s21, 1
    %s23 = scalar_select %p20, %s21, %s22
    %p26 = pneg %p20
    %p27 = scmp.eq.s32.totalorder %s11, 1
    %p28 = por %p26, %p27
    %p29 = scmp.ne.s32.totalorder %s21, %s24
    %p30 = scmp.eq.s32.totalorder %s11, 0
    %p31 = por %p29, %p30
    %p32 = scmp.ne.s32.totalorder %s21, %s24
    %p33 = scmp.eq.s32.totalorder %s16, 1
    %p34 = por %p32, %p33
    %p35 = scmp.ne.s32.totalorder %s24, %s25
    %p36 = scmp.eq.s32.totalorder %s16, 0
    %p37 = por %p35, %p36
    %p38 = scmp.ne.s32.totalorder %s24, %s25
    %p39 = scmp.eq.s32.totalorder %s17, 1
    %p40 = por %p38, %p39
    %p42 = scmp.ne.s32.totalorder %s25, %s41
    %p43 = scmp.eq.s32.totalorder %s17, 0
    %p44 = por %p42, %p43
    %s46 = sadd.s32 %s45, 1
    %p49 = scmp.eq.s32.totalorder %s11, 1
    %p50 = scmp.ne.s32.totalorder %s45, %s47
    %p51 = scmp.eq.s32.totalorder %s11, 0
    %p52 = por %p50, %p51
    %p53 = scmp.ne.s32.totalorder %s45, %s47
    %p54 = scmp.eq.s32.totalorder %s16, 1
    %p55 = por %p53, %p54
    %p56 = scmp.ne.s32.totalorder %s47, %s48
    %p57 = scmp.eq.s32.totalorder %s16, 0
    %p58 = por %p56, %p57
    %p59 = scmp.ne.s32.totalorder %s47, %s48
    %p60 = scmp.eq.s32.totalorder %s17, 1
    %p61 = por %p59, %p60
    %p63 = scmp.ne.s32.totalorder %s48, %s62
    %p64 = scmp.eq.s32.totalorder %s17, 0
    %p65 = por %p63, %p64
    %s67 = sadd.s32 %s66, 1
    %p70 = scmp.eq.s32.totalorder %s11, 1
    %p71 = scmp.ne.s32.totalorder %s66, %s68
    %p72 = scmp.eq.s32.totalorder %s11, 0
    %p73 = por %p71, %p72
    %p74 = scmp.ne.s32.totalorder %s66, %s68
    %p75 = scmp.eq.s32.totalorder %s16, 1
    %p76 = por %p74, %p75
    %p77 = scmp.ne.s32.totalorder %s68, %s69
    %p78 = scmp.eq.s32.totalorder %s16, 0
    %p79 = por %p77, %p78
    %p80 = scmp.ne.s32.totalorder %s68, %s69
    %p81 = scmp.eq.s32.totalorder %s17, 1
    %p82 = por %p80, %p81
    %p84 = scmp.ne.s32.totalorder %s69, %s83
    %p85 = scmp.eq.s32.totalorder %s17, 0
    %p86 = por %p84, %p85
    %s88 = sadd.s32 %s87, 1
    %p91 = scmp.eq.s32.totalorder %s11, 1
    %p92 = scmp.ne.s32.totalorder %s87, %s89
    %p93 = scmp.eq.s32.totalorder %s11, 0
    %p94 = por %p92, %p93
    %p95 = scmp.ne.s32.totalorder %s87, %s89
    %p96 = scmp.eq.s32.totalorder %s16, 1
    %p97 = por %p95, %p96
    %p98 = scmp.ne.s32.totalorder %s89, %s90
    %p99 = scmp.eq.s32.totalorder %s16, 0
    %p100 = por %p98, %p99
    %p101 = scmp.ne.s32.totalorder %s89, %s90
    %p102 = scmp.eq.s32.totalorder %s17, 1
    %p103 = por %p101, %p102
    %p105 = scmp.ne.s32.totalorder %s90, %s104
    %p106 = scmp.eq.s32.totalorder %s17, 0
    %p107 = por %p105, %p106
    %s109 = sadd.s32 %s108, 1
    %p112 = scmp.eq.s32.totalorder %s11, 1
    %p113 = scmp.ne.s32.totalorder %s108, %s110
    %p114 = scmp.eq.s32.totalorder %s11, 0
    %p115 = por %p113, %p114
    %p116 = scmp.ne.s32.totalorder %s108, %s110
    %p117 = scmp.eq.s32.totalorder %s16, 1
    %p118 = por %p116, %p117
    %p119 = scmp.ne.s32.totalorder %s110, %s111
    %p120 = scmp.eq.s32.totalorder %s16, 0
    %p121 = por %p119, %p120
    %p122 = scmp.ne.s32.totalorder %s110, %s111
    %p123 = scmp.eq.s32.totalorder %s17, 1
    %p124 = por %p122, %p123
    %p126 = scmp.ne.s32.totalorder %s111, %s125
    %p127 = scmp.eq.s32.totalorder %s17, 0
    %p128 = por %p126, %p127
    %s129 = ssub.s32 %s11, %s18
    %p130 = scmp.eq.s32.totalorder %s129, 0
    %s132 = sadd.s32 %s131, 1
    %s133 = scalar_select %p130, %s131, %s132
    %p136 = pneg %p130
    %p137 = scmp.eq.s32.totalorder %s11, 1
    %p138 = por %p136, %p137
    %p139 = scmp.ne.s32.totalorder %s131, %s134
    %p140 = scmp.eq.s32.totalorder %s11, 0
    %p141 = por %p139, %p140
    %p142 = scmp.ne.s32.totalorder %s131, %s134
    %p143 = scmp.eq.s32.totalorder %s16, 1
    %p144 = por %p142, %p143
    %p145 = scmp.ne.s32.totalorder %s134, %s135
    %p146 = scmp.eq.s32.totalorder %s16, 0
    %p147 = por %p145, %p146
    %p148 = scmp.ne.s32.totalorder %s134, %s135
    %p149 = scmp.eq.s32.totalorder %s17, 1
    %p150 = por %p148, %p149
    %p152 = scmp.ne.s32.totalorder %s135, %s151
    %p153 = scmp.eq.s32.totalorder %s17, 0
    %p154 = por %p152, %p153
    %p155 = scmp.le.s32.totalorder 1, %s11
    %p156 = scmp.lt.s32.totalorder %s11, 3
    %p157 = pnand %p155, %p156
    %p158 = pneg %p157
    // Predicated region
    $region9: #{forecast.6} parent=5 // pred_check
      _
    $region10: #{forecast.6} parent=5 // pred_check_branch
      %160 = sbr.rel (%p157) target = $region12
    $region11: #{forecast.6} parent=5 // pred_region
      %s161 = ssub.s32 %s11, 1
      // Predicated region
      $region13: #{forecast.6} parent=11 // pred_check
        %p162 = pneg %p58
      $region14: #{forecast.6} parent=11 // pred_check_branch
        %164 = sbr.rel (%p162) target = $region16
      $region15: #{forecast.6} parent=11 // pred_region
        _
      $region16: #{forecast.6} parent=11 // pred_fallthru
        _
      // Predicated region
      $region17: #{forecast.6} parent=11 // pred_check
        %p165 = pneg %p79
      $region18: #{forecast.6} parent=11 // pred_check_branch
        %167 = sbr.rel (%p165) target = $region20
      $region19: #{forecast.6} parent=11 // pred_region
        _
      $region20: #{forecast.6} parent=11 // pred_fallthru
        _
      // Predicated region
      $region21: #{forecast.6} parent=11 // pred_check
        %p168 = pneg %p100
      $region22: #{forecast.6} parent=11 // pred_check_branch
        %170 = sbr.rel (%p168) target = $region24
      $region23: #{forecast.6} parent=11 // pred_region
        _
      $region24: #{forecast.6} parent=11 // pred_fallthru
        _
      // Predicated region
      $region25: #{forecast.6} parent=11 // pred_check
        %p171 = pneg %p121
      $region26: #{forecast.6} parent=11 // pred_check_branch
        %173 = sbr.rel (%p171) target = $region28
      $region27: #{forecast.6} parent=11 // pred_region
        _
      $region28: #{forecast.6} parent=11 // pred_fallthru
        _
    $region12: #{forecast.6} parent=5 // pred_fallthru
      _
    %p174 = scmp.lt.s32.totalorder %s11, 2
    // Predicated region
    $region29: #{forecast.6} parent=5 // pred_check
      %p175 = pneg %p174
    $region30: #{forecast.6} parent=5 // pred_check_branch
      %177 = sbr.rel (%p175) target = $region32
    $region31: #{forecast.6} parent=5 // pred_region
      // Predicated region
      $region33: #{forecast.6} parent=31 // pred_check
        %p178 = pneg %p31
      $region34: #{forecast.6} parent=31 // pred_check_branch
        %180 = sbr.rel (%p178) target = $region36
      $region35: #{forecast.6} parent=31 // pred_region
        %s181 = smul.u32 4, %s11
        %p182 = scmp.lt.s32.totalorder %s181, 7
        %s183 = scalar_select %p182, %s181, 7
        %s184 = smul.addr %s183, 3
        %s185 = smul.addr %s184, 8
        %s186 = scalar_lea.vmem %s0, %s185
        %s187 = smul.u32 4, %s11
      $region36: #{forecast.6} parent=31 // pred_fallthru
        _
    $region32: #{forecast.6} parent=5 // pred_fallthru
      _
    %p188 = scmp.le.s32.totalorder 1, %s11
    %p189 = scmp.lt.s32.totalorder %s11, 3
    %p190 = pnand %p188, %p189
    %p191 = pneg %p190
    // Predicated region
    $region37: #{forecast.6} parent=5 // pred_check
      _
    $region38: #{forecast.6} parent=5 // pred_check_branch
      %193 = sbr.rel (%p190) target = $region40
    $region39: #{forecast.6} parent=5 // pred_region
      %s194 = ssub.s32 %s11, 1
      %s195 = smul.u32 4, %s16
      %p196 = scmp.lt.s32.totalorder %s195, 7
      %s197 = scalar_select %p196, %s195, 7
      %s198 = smul.addr %s197, 3
      %s199 = smul.addr %s198, 8
      %s200 = scalar_lea.vmem %s0, %s199
      %p201 = pneg %p37
      %p202 = pneg %p34
      %p203 = pneg %p58
      %p204 = pneg %p55
      %p205 = pneg %p79
      %p206 = pneg %p76
      %p207 = pneg %p100
      %p208 = pneg %p97
      %p209 = pneg %p121
      %p210 = pneg %p118
      %p211 = pneg %p147
      %p212 = pneg %p144
      %s213 = smul.u32 4, %s16
      %p214 = scmp.lt.s32.totalorder %s213, 7
      %s215 = scalar_select %p214, %s213, 7
      %s216 = smul.addr %s215, 3
      %s217 = smul.addr %s216, 8
      %s218 = scalar_lea.vmem %s5, %s217
      %s219 = smul.u32 4, %s16
      %p220 = scmp.lt.s32.totalorder %s219, 7
      %s221 = scalar_select %p220, %s219, 7
      %s222 = smul.addr %s221, 3
      %s223 = smul.addr %s222, 8
      %s224 = scalar_lea.vmem %s0, %s223
      %s225 = smul.u32 4, %s16
      %s226 = smul.u32 4, %s16
      %p227 = scmp.lt.s32.totalorder %s226, 7
      %s228 = scalar_select %p227, %s226, 7
      %s229 = smul.addr %s228, 3
      %s230 = smul.addr %s229, 8
      %s231 = scalar_lea.vmem %s5, %s230
      %s232 = smul.u32 4, %s16
      %v234 = vld [vmem:[%s224] sm:$0xff]
      %v235 = vld [vmem:[%s224 + $0x8] sm:$0xff]
      %v236 = vld [vmem:[%s224 + $0x10] sm:$0xff]
      %v237 = vld [vmem:[%s224 + $0x18] sm:$0xff]
      %v238 = vld [vmem:[%s224 + $0x20] sm:$0xff]
      %v239 = vld [vmem:[%s224 + $0x28] sm:$0xff]
      %v240 = vld [vmem:[%s224 + $0x30] sm:$0xff]
      %v241 = vld [vmem:[%s224 + $0x38] sm:$0xff]
      %v242 = vld [vmem:[%s224 + $0x40] sm:$0xff]
      %v243 = vld [vmem:[%s224 + $0x48] sm:$0xff]
      %v244 = vld [vmem:[%s224 + $0x50] sm:$0xff]
      %v245 = vld [vmem:[%s224 + $0x58] sm:$0xff]
      %v246 = vadd.f32 %v234, %v235
      %v247 = vadd.f32 %v246, %v236
      %248 = vadd.xlane.f32.xlu0 %v247
      %v249 = vpop.xlane.xlu0 %248
      %v250 = vadd.f32 %v237, %v238
      %v251 = vadd.f32 %v250, %v239
      %252 = vadd.xlane.f32.xlu0 %v251
      %v253 = vpop.xlane.xlu0 %252
      %v254 = vadd.f32 %v240, %v241
      %v255 = vadd.f32 %v254, %v242
      %256 = vadd.xlane.f32.xlu0 %v255
      %v257 = vpop.xlane.xlu0 %256
      %v258 = vadd.f32 %v243, %v244
      %v259 = vadd.f32 %v258, %v245
      %260 = vadd.xlane.f32.xlu0 %v259
      %v261 = vpop.xlane.xlu0 %260
      %v262 = vrcp.pop 384.0
      %v263 = vmul.f32 %v249, %v262
      %v264 = vmul.f32 %v253, %v262
      %v265 = vmul.f32 %v257, %v262
      %v266 = vmul.f32 %v261, %v262
      %v267 = vsub.f32 %v234, %v263
      %v268 = vsub.f32 %v235, %v263
      %v269 = vsub.f32 %v236, %v263
      %v270 = vsub.f32 %v237, %v264
      %v271 = vsub.f32 %v238, %v264
      %v272 = vsub.f32 %v239, %v264
      %v273 = vsub.f32 %v240, %v265
      %v274 = vsub.f32 %v241, %v265
      %v275 = vsub.f32 %v242, %v265
      %v276 = vsub.f32 %v243, %v266
      %v277 = vsub.f32 %v244, %v266
      %v278 = vsub.f32 %v245, %v266
      %v279 = vmul.f32 %v267, %v267
      %v280 = vmul.f32 %v268, %v268
      %v281 = vmul.f32 %v269, %v269
      %v282 = vmul.f32 %v270, %v270
      %v283 = vmul.f32 %v271, %v271
      %v284 = vmul.f32 %v272, %v272
      %v285 = vmul.f32 %v273, %v273
      %v286 = vmul.f32 %v274, %v274
      %v287 = vmul.f32 %v275, %v275
      %v288 = vmul.f32 %v276, %v276
      %v289 = vmul.f32 %v277, %v277
      %v290 = vmul.f32 %v278, %v278
      %v291 = vadd.f32 %v279, %v280
      %v292 = vadd.f32 %v291, %v281
      %293 = vadd.xlane.f32.xlu0 %v292
      %v294 = vpop.xlane.xlu0 %293
      %v295 = vadd.f32 %v282, %v283
      %v296 = vadd.f32 %v295, %v284
      %297 = vadd.xlane.f32.xlu0 %v296
      %v298 = vpop.xlane.xlu0 %297
      %v299 = vadd.f32 %v285, %v286
      %v300 = vadd.f32 %v299, %v287
      %301 = vadd.xlane.f32.xlu0 %v300
      %v302 = vpop.xlane.xlu0 %301
      %v303 = vadd.f32 %v288, %v289
      %v304 = vadd.f32 %v303, %v290
      %305 = vadd.xlane.f32.xlu0 %v304
      %v306 = vpop.xlane.xlu0 %305
      %v307 = vmul.f32 %v294, %v262
      %v308 = vmul.f32 %v298, %v262
      %v309 = vmul.f32 %v302, %v262
      %v310 = vmul.f32 %v306, %v262
      %v311 = vadd.f32 %v307, 1e-05
      %v312 = vadd.f32 %v308, 1e-05
      %v313 = vadd.f32 %v309, 1e-05
      %v314 = vadd.f32 %v310, 1e-05
      %v315 = vrsqrt.pop %v311
      %v316 = vrsqrt.pop %v312
      %v317 = vrsqrt.pop %v313
      %v318 = vrsqrt.pop %v314
      %v319 = vmul.f32 %v267, %v315
      %v320 = vmul.f32 %v268, %v315
      %v321 = vmul.f32 %v269, %v315
      %v322 = vmul.f32 %v270, %v316
      %v323 = vmul.f32 %v271, %v316
      %v324 = vmul.f32 %v272, %v316
      %v325 = vmul.f32 %v273, %v317
      %v326 = vmul.f32 %v274, %v317
      %v327 = vmul.f32 %v275, %v317
      %v328 = vmul.f32 %v276, %v318
      %v329 = vmul.f32 %v277, %v318
      %v330 = vmul.f32 %v278, %v318
      %v331 = vld [vmem:[%s1] sm:$0x7]
      %v333 = vlaneseq
      %v334 = vshrl.u32 %v333, 7
      %v335 = vsub.s32 0, %v334
      %v336 = vrot.slane %v331, %v335
      %v337 = vlaneseq
      %v338 = vshrl.u32 %v337, 7
      %v339 = vsub.s32 1, %v338
      %v340 = vrot.slane %v331, %v339
      %v341 = vlaneseq
      %v342 = vshrl.u32 %v341, 7
      %v343 = vsub.s32 2, %v342
      %v344 = vrot.slane %v331, %v343
      %v348 = vmul.f32 %v319, %v336
      %v349 = vmul.f32 %v320, %v340
      %v350 = vmul.f32 %v321, %v344
      %v351 = vmul.f32 %v322, %v336
      %v352 = vmul.f32 %v323, %v340
      %v353 = vmul.f32 %v324, %v344
      %v354 = vmul.f32 %v325, %v336
      %v355 = vmul.f32 %v326, %v340
      %v356 = vmul.f32 %v327, %v344
      %v357 = vmul.f32 %v328, %v336
      %v358 = vmul.f32 %v329, %v340
      %v359 = vmul.f32 %v330, %v344
      %v360 = vld [vmem:[%s2] sm:$0x7]
      %v362 = vlaneseq
      %v363 = vshrl.u32 %v362, 7
      %v364 = vsub.s32 0, %v363
      %v365 = vrot.slane %v360, %v364
      %v366 = vlaneseq
      %v367 = vshrl.u32 %v366, 7
      %v368 = vsub.s32 1, %v367
      %v369 = vrot.slane %v360, %v368
      %v370 = vlaneseq
      %v371 = vshrl.u32 %v370, 7
      %v372 = vsub.s32 2, %v371
      %v373 = vrot.slane %v360, %v372
      %v377 = vadd.f32 %v348, %v365
      %v378 = vadd.f32 %v349, %v369
      %v379 = vadd.f32 %v350, %v373
      %v380 = vadd.f32 %v351, %v365
      %v381 = vadd.f32 %v352, %v369
      %v382 = vadd.f32 %v353, %v373
      %v383 = vadd.f32 %v354, %v365
      %v384 = vadd.f32 %v355, %v369
      %v385 = vadd.f32 %v356, %v373
      %v386 = vadd.f32 %v357, %v365
      %v387 = vadd.f32 %v358, %v369
      %v388 = vadd.f32 %v359, %v373
      %v389 = vpack.c.bf16 %v380, %v377
      %v390 = vpack.c.bf16 %v381, %v378
      %v391 = vpack.c.bf16 %v382, %v379
      %v392 = vpack.c.bf16 %v386, %v383
      %v393 = vpack.c.bf16 %v387, %v384
      %v394 = vpack.c.bf16 %v388, %v385
      %v395 = vld [vmem:[%s3] sm:$0xff]
      %v396 = vld [vmem:[%s3 + $0x8] sm:$0xf]
      %v397 = vld [vmem:[%s3 + $0xc] sm:$0xff]
      %v398 = vld [vmem:[%s3 + $0x14] sm:$0xf]
      %v399 = vld [vmem:[%s3 + $0x18] sm:$0xff]
      %v400 = vld [vmem:[%s3 + $0x20] sm:$0xf]
      %v401 = vld [vmem:[%s3 + $0x24] sm:$0xff]
      %v402 = vld [vmem:[%s3 + $0x2c] sm:$0xf]
      %v403 = vld [vmem:[%s3 + $0x30] sm:$0xff]
      %v404 = vld [vmem:[%s3 + $0x38] sm:$0xf]
      %v405 = vld [vmem:[%s3 + $0x3c] sm:$0xff]
      %v406 = vld [vmem:[%s3 + $0x44] sm:$0xf]
      %v407 = vld [vmem:[%s3 + $0x48] sm:$0xff]
      %v408 = vld [vmem:[%s3 + $0x50] sm:$0xf]
      %v409 = vld [vmem:[%s3 + $0x54] sm:$0xff]
      %v410 = vld [vmem:[%s3 + $0x5c] sm:$0xf]
      %v411 = vld [vmem:[%s3 + $0x60] sm:$0xff]
      %v412 = vld [vmem:[%s3 + $0x68] sm:$0xf]
      %v413 = vld [vmem:[%s3 + $0x6c] sm:$0xff]
      %v414 = vld [vmem:[%s3 + $0x74] sm:$0xf]
      %v415 = vld [vmem:[%s3 + $0x78] sm:$0xff]
      %v416 = vld [vmem:[%s3 + $0x80] sm:$0xf]
      %v417 = vld [vmem:[%s3 + $0x84] sm:$0xff]
      %v418 = vld [vmem:[%s3 + $0x8c] sm:$0xf]
      %v419 = vld [vmem:[%s3 + $0x90] sm:$0xff]
      %v420 = vld [vmem:[%s3 + $0x98] sm:$0xf]
      %v421 = vld [vmem:[%s3 + $0x9c] sm:$0xff]
      %v422 = vld [vmem:[%s3 + $0xa4] sm:$0xf]
      %v423 = vld [vmem:[%s3 + $0xa8] sm:$0xff]
      %v424 = vld [vmem:[%s3 + $0xb0] sm:$0xf]
      %v425 = vld [vmem:[%s3 + $0xb4] sm:$0xff]
      %v426 = vld [vmem:[%s3 + $0xbc] sm:$0xf]
      %v427 = vld [vmem:[%s3 + $0xc0] sm:$0xff]
      %v428 = vld [vmem:[%s3 + $0xc8] sm:$0xf]
      %v429 = vld [vmem:[%s3 + $0xcc] sm:$0xff]
      %v430 = vld [vmem:[%s3 + $0xd4] sm:$0xf]
      %v431 = vld [vmem:[%s3 + $0xd8] sm:$0xff]
      %v432 = vld [vmem:[%s3 + $0xe0] sm:$0xf]
      %v433 = vld [vmem:[%s3 + $0xe4] sm:$0xff]
      %v434 = vld [vmem:[%s3 + $0xec] sm:$0xf]
      %v435 = vld [vmem:[%s3 + $0xf0] sm:$0xff]
      %v436 = vld [vmem:[%s3 + $0xf8] sm:$0xf]
      %v437 = vld [vmem:[%s3 + $0xfc] sm:$0xff]
      %v438 = vld [vmem:[%s3 + $0x104] sm:$0xf]
      %v439 = vld [vmem:[%s3 + $0x108] sm:$0xff]
      %v440 = vld [vmem:[%s3 + $0x110] sm:$0xf]
      %v441 = vld [vmem:[%s3 + $0x114] sm:$0xff]
      %v442 = vld [vmem:[%s3 + $0x11c] sm:$0xf]
      %v443 = vld [vmem:[%s3 + $0x120] sm:$0xff]
      %v444 = vld [vmem:[%s3 + $0x128] sm:$0xf]
      %v445 = vld [vmem:[%s3 + $0x12c] sm:$0xff]
      %v446 = vld [vmem:[%s3 + $0x134] sm:$0xf]
      %v447 = vld [vmem:[%s3 + $0x138] sm:$0xff]
      %v448 = vld [vmem:[%s3 + $0x140] sm:$0xf]
      %v449 = vld [vmem:[%s3 + $0x144] sm:$0xff]
      %v450 = vld [vmem:[%s3 + $0x14c] sm:$0xf]
      %v451 = vld [vmem:[%s3 + $0x150] sm:$0xff]
      %v452 = vld [vmem:[%s3 + $0x158] sm:$0xf]
      %v453 = vld [vmem:[%s3 + $0x15c] sm:$0xff]
      %v454 = vld [vmem:[%s3 + $0x164] sm:$0xf]
      %v455 = vld [vmem:[%s3 + $0x168] sm:$0xff]
      %v456 = vld [vmem:[%s3 + $0x170] sm:$0xf]
      %v457 = vld [vmem:[%s3 + $0x174] sm:$0xff]
      %v458 = vld [vmem:[%s3 + $0x17c] sm:$0xf]
      %v459 = vld [vmem:[%s3 + $0x180] sm:$0xff]
      %v460 = vld [vmem:[%s3 + $0x188] sm:$0xf]
      %v461 = vld [vmem:[%s3 + $0x18c] sm:$0xff]
      %v462 = vld [vmem:[%s3 + $0x194] sm:$0xf]
      %v463 = vld [vmem:[%s3 + $0x198] sm:$0xff]
      %v464 = vld [vmem:[%s3 + $0x1a0] sm:$0xf]
      %v465 = vld [vmem:[%s3 + $0x1a4] sm:$0xff]
      %v466 = vld [vmem:[%s3 + $0x1ac] sm:$0xf]
      %v467 = vld [vmem:[%s3 + $0x1b0] sm:$0xff]
      %v468 = vld [vmem:[%s3 + $0x1b8] sm:$0xf]
      %v469 = vld [vmem:[%s3 + $0x1bc] sm:$0xff]
      %v470 = vld [vmem:[%s3 + $0x1c4] sm:$0xf]
      %v471 = vld [vmem:[%s3 + $0x1c8] sm:$0xff]
      %v472 = vld [vmem:[%s3 + $0x1d0] sm:$0xf]
      %v473 = vld [vmem:[%s3 + $0x1d4] sm:$0xff]
      %v474 = vld [vmem:[%s3 + $0x1dc] sm:$0xf]
      %v475 = vld [vmem:[%s3 + $0x1e0] sm:$0xff]
      %v476 = vld [vmem:[%s3 + $0x1e8] sm:$0xf]
      %v477 = vld [vmem:[%s3 + $0x1ec] sm:$0xff]
      %v478 = vld [vmem:[%s3 + $0x1f4] sm:$0xf]
      %v479 = vld [vmem:[%s3 + $0x1f8] sm:$0xff]
      %v480 = vld [vmem:[%s3 + $0x200] sm:$0xf]
      %v481 = vld [vmem:[%s3 + $0x204] sm:$0xff]
      %v482 = vld [vmem:[%s3 + $0x20c] sm:$0xf]
      %v483 = vld [vmem:[%s3 + $0x210] sm:$0xff]
      %v484 = vld [vmem:[%s3 + $0x218] sm:$0xf]
      %v485 = vld [vmem:[%s3 + $0x21c] sm:$0xff]
      %v486 = vld [vmem:[%s3 + $0x224] sm:$0xf]
      %v487 = vld [vmem:[%s3 + $0x228] sm:$0xff]
      %v488 = vld [vmem:[%s3 + $0x230] sm:$0xf]
      %v489 = vld [vmem:[%s3 + $0x234] sm:$0xff]
      %v490 = vld [vmem:[%s3 + $0x23c] sm:$0xf]
      %v491 = vld [vmem:[%s4] sm:$0x7]
      %v493 = vlaneseq
      %v494 = vshrl.u32 %v493, 7
      %v495 = vsub.s32 0, %v494
      %v496 = vrot.slane %v491, %v495
      %v497 = vlaneseq
      %v498 = vshrl.u32 %v497, 7
      %v499 = vsub.s32 1, %v498
      %v500 = vrot.slane %v491, %v499
      %v501 = vlaneseq
      %v502 = vshrl.u32 %v501, 7
      %v503 = vsub.s32 2, %v502
      %v504 = vrot.slane %v491, %v503
      %v604 = vunpack.c.l.b16 %v395
      %v605 = vunpack.c.h.b16 %v395
      %v606 = vunpack.c.l.b16 %v396
      %v607 = vunpack.c.l.b16 %v397
      %v608 = vunpack.c.h.b16 %v397
      %v609 = vunpack.c.l.b16 %v398
      %v610 = vunpack.c.l.b16 %v399
      %v611 = vunpack.c.h.b16 %v399
      %v612 = vunpack.c.l.b16 %v400
      %v613 = vunpack.c.l.b16 %v401
      %v614 = vunpack.c.h.b16 %v401
      %v615 = vunpack.c.l.b16 %v402
      %v616 = vunpack.c.l.b16 %v403
      %v617 = vunpack.c.h.b16 %v403
      %v618 = vunpack.c.l.b16 %v404
      %v619 = vunpack.c.l.b16 %v405
      %v620 = vunpack.c.h.b16 %v405
      %v621 = vunpack.c.l.b16 %v406
      %v622 = vunpack.c.l.b16 %v407
      %v623 = vunpack.c.h.b16 %v407
      %v624 = vunpack.c.l.b16 %v408
      %v625 = vunpack.c.l.b16 %v409
      %v626 = vunpack.c.h.b16 %v409
      %v627 = vunpack.c.l.b16 %v410
      %v628 = vunpack.c.l.b16 %v411
      %v629 = vunpack.c.h.b16 %v411
      %v630 = vunpack.c.l.b16 %v412
      %v631 = vunpack.c.l.b16 %v413
      %v632 = vunpack.c.h.b16 %v413
      %v633 = vunpack.c.l.b16 %v414
      %v634 = vunpack.c.l.b16 %v415
      %v635 = vunpack.c.h.b16 %v415
      %v636 = vunpack.c.l.b16 %v416
      %v637 = vunpack.c.l.b16 %v417
      %v638 = vunpack.c.h.b16 %v417
      %v639 = vunpack.c.l.b16 %v418
      %v640 = vunpack.c.l.b16 %v419
      %v641 = vunpack.c.h.b16 %v419
      %v642 = vunpack.c.l.b16 %v420
      %v643 = vunpack.c.l.b16 %v421
      %v644 = vunpack.c.h.b16 %v421
      %v645 = vunpack.c.l.b16 %v422
      %v646 = vunpack.c.l.b16 %v423
      %v647 = vunpack.c.h.b16 %v423
      %v648 = vunpack.c.l.b16 %v424
      %v649 = vunpack.c.l.b16 %v425
      %v650 = vunpack.c.h.b16 %v425
      %v651 = vunpack.c.l.b16 %v426
      %v652 = vunpack.c.l.b16 %v427
      %v653 = vunpack.c.h.b16 %v427
      %v654 = vunpack.c.l.b16 %v428
      %v655 = vunpack.c.l.b16 %v429
      %v656 = vunpack.c.h.b16 %v429
      %v657 = vunpack.c.l.b16 %v430
      %v658 = vunpack.c.l.b16 %v431
      %v659 = vunpack.c.h.b16 %v431
      %v660 = vunpack.c.l.b16 %v432
      %v661 = vunpack.c.l.b16 %v433
      %v662 = vunpack.c.h.b16 %v433
      %v663 = vunpack.c.l.b16 %v434
      %v664 = vunpack.c.l.b16 %v435
      %v665 = vunpack.c.h.b16 %v435
      %v666 = vunpack.c.l.b16 %v436
      %v667 = vunpack.c.l.b16 %v437
      %v668 = vunpack.c.h.b16 %v437
      %v669 = vunpack.c.l.b16 %v438
      %v670 = vunpack.c.l.b16 %v439
      %v671 = vunpack.c.h.b16 %v439
      %v672 = vunpack.c.l.b16 %v440
      %v673 = vunpack.c.l.b16 %v441
      %v674 = vunpack.c.h.b16 %v441
      %v675 = vunpack.c.l.b16 %v442
      %v676 = vunpack.c.l.b16 %v443
      %v677 = vunpack.c.h.b16 %v443
      %v678 = vunpack.c.l.b16 %v444
      %v679 = vunpack.c.l.b16 %v445
      %v680 = vunpack.c.h.b16 %v445
      %v681 = vunpack.c.l.b16 %v446
      %v682 = vunpack.c.l.b16 %v447
      %v683 = vunpack.c.h.b16 %v447
      %v684 = vunpack.c.l.b16 %v448
      %v685 = vunpack.c.l.b16 %v449
      %v686 = vunpack.c.h.b16 %v449
      %v687 = vunpack.c.l.b16 %v450
      %v688 = vunpack.c.l.b16 %v451
      %v689 = vunpack.c.h.b16 %v451
      %v690 = vunpack.c.l.b16 %v452
      %v691 = vunpack.c.l.b16 %v453
      %v692 = vunpack.c.h.b16 %v453
      %v693 = vunpack.c.l.b16 %v454
      %v694 = vunpack.c.l.b16 %v455
      %v695 = vunpack.c.h.b16 %v455
      %v696 = vunpack.c.l.b16 %v456
      %v697 = vunpack.c.l.b16 %v457
      %v698 = vunpack.c.h.b16 %v457
      %v699 = vunpack.c.l.b16 %v458
      %v700 = vunpack.c.l.b16 %v459
      %v701 = vunpack.c.h.b16 %v459
      %v702 = vunpack.c.l.b16 %v460
      %v703 = vunpack.c.l.b16 %v461
      %v704 = vunpack.c.h.b16 %v461
      %v705 = vunpack.c.l.b16 %v462
      %v706 = vunpack.c.l.b16 %v463
      %v707 = vunpack.c.h.b16 %v463
      %v708 = vunpack.c.l.b16 %v464
      %v709 = vunpack.c.l.b16 %v465
      %v710 = vunpack.c.h.b16 %v465
      %v711 = vunpack.c.l.b16 %v466
      %v712 = vunpack.c.l.b16 %v467
      %v713 = vunpack.c.h.b16 %v467
      %v714 = vunpack.c.l.b16 %v468
      %v715 = vunpack.c.l.b16 %v469
      %v716 = vunpack.c.h.b16 %v469
      %v717 = vunpack.c.l.b16 %v470
      %v718 = vunpack.c.l.b16 %v471
      %v719 = vunpack.c.h.b16 %v471
      %v720 = vunpack.c.l.b16 %v472
      %v721 = vunpack.c.l.b16 %v473
      %v722 = vunpack.c.h.b16 %v473
      %v723 = vunpack.c.l.b16 %v474
      %v724 = vunpack.c.l.b16 %v475
      %v725 = vunpack.c.h.b16 %v475
      %v726 = vunpack.c.l.b16 %v476
      %v727 = vunpack.c.l.b16 %v477
      %v728 = vunpack.c.h.b16 %v477
      %v729 = vunpack.c.l.b16 %v478
      %v730 = vunpack.c.l.b16 %v479
      %v731 = vunpack.c.h.b16 %v479
      %v732 = vunpack.c.l.b16 %v480
      %v733 = vunpack.c.l.b16 %v481
      %v734 = vunpack.c.h.b16 %v481
      %v735 = vunpack.c.l.b16 %v482
      %v736 = vunpack.c.l.b16 %v483
      %v737 = vunpack.c.h.b16 %v483
      %v738 = vunpack.c.l.b16 %v484
      %v739 = vunpack.c.l.b16 %v485
      %v740 = vunpack.c.h.b16 %v485
      %v741 = vunpack.c.l.b16 %v486
      %v742 = vunpack.c.l.b16 %v487
      %v743 = vunpack.c.h.b16 %v487
      %v744 = vunpack.c.l.b16 %v488
      %v745 = vunpack.c.l.b16 %v489
      %v746 = vunpack.c.h.b16 %v489
      %v747 = vunpack.c.l.b16 %v490
      %v748 = vpack.c.b16 %v607, %v604
      %v749 = vpack.c.b16 %v608, %v605
      %v750 = vpack.c.b16 %v609, %v606
      %v751 = vpack.c.b16 %v613, %v610
      %v752 = vpack.c.b16 %v614, %v611
      %v753 = vpack.c.b16 %v615, %v612
      %v754 = vpack.c.b16 %v619, %v616
      %v755 = vpack.c.b16 %v620, %v617
      %v756 = vpack.c.b16 %v621, %v618
      %v757 = vpack.c.b16 %v625, %v622
      %v758 = vpack.c.b16 %v626, %v623
      %v759 = vpack.c.b16 %v627, %v624
      %v760 = vpack.c.b16 %v631, %v628
      %v761 = vpack.c.b16 %v632, %v629
      %v762 = vpack.c.b16 %v633, %v630
      %v763 = vpack.c.b16 %v637, %v634
      %v764 = vpack.c.b16 %v638, %v635
      %v765 = vpack.c.b16 %v639, %v636
      %v766 = vpack.c.b16 %v643, %v640
      %v767 = vpack.c.b16 %v644, %v641
      %v768 = vpack.c.b16 %v645, %v642
      %v769 = vpack.c.b16 %v649, %v646
      %v770 = vpack.c.b16 %v650, %v647
      %v771 = vpack.c.b16 %v651, %v648
      %v772 = vpack.c.b16 %v655, %v652
      %v773 = vpack.c.b16 %v656, %v653
      %v774 = vpack.c.b16 %v657, %v654
      %v775 = vpack.c.b16 %v661, %v658
      %v776 = vpack.c.b16 %v662, %v659
      %v777 = vpack.c.b16 %v663, %v660
      %v778 = vpack.c.b16 %v667, %v664
      %v779 = vpack.c.b16 %v668, %v665
      %v780 = vpack.c.b16 %v669, %v666
      %v781 = vpack.c.b16 %v673, %v670
      %v782 = vpack.c.b16 %v674, %v671
      %v783 = vpack.c.b16 %v675, %v672
      %v784 = vpack.c.b16 %v679, %v676
      %v785 = vpack.c.b16 %v680, %v677
      %v786 = vpack.c.b16 %v681, %v678
      %v787 = vpack.c.b16 %v685, %v682
      %v788 = vpack.c.b16 %v686, %v683
      %v789 = vpack.c.b16 %v687, %v684
      %v790 = vpack.c.b16 %v691, %v688
      %v791 = vpack.c.b16 %v692, %v689
      %v792 = vpack.c.b16 %v693, %v690
      %v793 = vpack.c.b16 %v697, %v694
      %v794 = vpack.c.b16 %v698, %v695
      %v795 = vpack.c.b16 %v699, %v696
      %v796 = vpack.c.b16 %v703, %v700
      %v797 = vpack.c.b16 %v704, %v701
      %v798 = vpack.c.b16 %v705, %v702
      %v799 = vpack.c.b16 %v709, %v706
      %v800 = vpack.c.b16 %v710, %v707
      %v801 = vpack.c.b16 %v711, %v708
      %v802 = vpack.c.b16 %v715, %v712
      %v803 = vpack.c.b16 %v716, %v713
      %v804 = vpack.c.b16 %v717, %v714
      %v805 = vpack.c.b16 %v721, %v718
      %v806 = vpack.c.b16 %v722, %v719
      %v807 = vpack.c.b16 %v723, %v720
      %v808 = vpack.c.b16 %v727, %v724
      %v809 = vpack.c.b16 %v728, %v725
      %v810 = vpack.c.b16 %v729, %v726
      %v811 = vpack.c.b16 %v733, %v730
      %v812 = vpack.c.b16 %v734, %v731
      %v813 = vpack.c.b16 %v735, %v732
      %v814 = vpack.c.b16 %v739, %v736
      %v815 = vpack.c.b16 %v740, %v737
      %v816 = vpack.c.b16 %v741, %v738
      %v817 = vpack.c.b16 %v745, %v742
      %v818 = vpack.c.b16 %v746, %v743
      %v819 = vpack.c.b16 %v747, %v744
      %892 = vmatprep.subr.bf16.mxu0 %v749
      %893 = vmatpush1.bf16.msra.mxu0 %v748
      %894 = vmatprep.subr.bf16.mxu0 %v752
      %895 = vmatpush1.bf16.msra.mxu0 %v751
      %896 = vmatprep.subr.bf16.mxu0 %v755
      %897 = vmatpush1.bf16.msra.mxu0 %v754
      %898 = vmatprep.subr.bf16.mxu0 %v758
      %899 = vmatpush1.bf16.msra.mxu0 %v757
      %900 = vmatprep.subr.bf16.mxu0 %v761
      %901 = vmatpush1.bf16.msra.mxu0 %v760
      %902 = vmatprep.subr.bf16.mxu0 %v764
      %903 = vmatpush1.bf16.msra.mxu0 %v763
      %904 = vmatprep.subr.bf16.mxu0 %v767
      %905 = vmatpush1.bf16.msra.mxu0 %v766
      %906 = vmatprep.subr.bf16.mxu0 %v770
      %907 = vmatpush1.bf16.msra.mxu0 %v769
      %908 = vmatprep.subr.bf16.mxu0 %v773
      %909 = vmatpush1.bf16.msra.mxu0 %v772
      %910 = vmatprep.subr.bf16.mxu0 %v776
      %911 = vmatpush1.bf16.msra.mxu0 %v775
      %912 = vmatprep.subr.bf16.mxu0 %v779
      %913 = vmatpush1.bf16.msra.mxu0 %v778
      %914 = vmatprep.subr.bf16.mxu0 %v782
      %915 = vmatpush1.bf16.msra.mxu0 %v781
      %916 = vmatprep.subr.bf16.mxu0 %v785
      %917 = vmatpush1.bf16.msra.mxu0 %v784
      %918 = vmatprep.subr.bf16.mxu0 %v788
      %919 = vmatpush1.bf16.msra.mxu0 %v787
      %920 = vmatprep.subr.bf16.mxu0 %v791
      %921 = vmatpush1.bf16.msra.mxu0 %v790
      %922 = vmatprep.subr.bf16.mxu0 %v794
      %923 = vmatpush1.bf16.msra.mxu0 %v793
      %924 = vmatprep.mubr.bf16.mxu0 %v390
      %925 = vmatmul.mubr.bf16.gmra.mrb[0].mxu0 %v389
      %v926 = vpop.f32.mrb[0].mxu0
      %v927 = vadd.f32 %v496, %v926
      %v928 = vpop.f32.mrb[0].mxu0
      %v929 = vadd.f32 %v500, %v928
      %v930 = vpop.f32.mrb[0].mxu0
      %v931 = vadd.f32 %v496, %v930
      %v932 = vpop.f32.mrb[0].mxu0
      %v933 = vadd.f32 %v500, %v932
      %934 = vmatprep.mubr.bf16.mxu0 %v393
      %935 = vmatmul.mubr.bf16.gmra.mrb[0].mxu0 %v392
      %v936 = vpop.f32.mrb[0].mxu0
      %v937 = vadd.f32 %v496, %v936
      %v938 = vpop.f32.mrb[0].mxu0
      %v939 = vadd.f32 %v500, %v938
      %v940 = vpop.f32.mrb[0].mxu0
      %v941 = vadd.f32 %v496, %v940
      %v942 = vpop.f32.mrb[0].mxu0
      %v943 = vadd.f32 %v500, %v942
      %944 = vdwg.mxu0
      %945 = vmatprep.subr.bf16.mxu0 %v797
      %946 = vmatpush1.bf16.msra.mxu0 %v796
      %947 = vmatprep.subr.bf16.mxu0 %v800
      %948 = vmatpush1.bf16.msra.mxu0 %v799
      %949 = vmatprep.subr.bf16.mxu0 %v803
      %950 = vmatpush1.bf16.msra.mxu0 %v802
      %951 = vmatprep.subr.bf16.mxu0 %v806
      %952 = vmatpush1.bf16.msra.mxu0 %v805
      %953 = vmatprep.subr.bf16.mxu0 %v809
      %954 = vmatpush1.bf16.msra.mxu0 %v808
      %955 = vmatprep.subr.bf16.mxu0 %v812
      %956 = vmatpush1.bf16.msra.mxu0 %v811
      %957 = vmatprep.subr.bf16.mxu0 %v815
      %958 = vmatpush1.bf16.msra.mxu0 %v814
      %959 = vmatprep.subr.bf16.mxu0 %v818
      %960 = vmatpush1.bf16.msra.mxu0 %v817
      %961 = vmatprep.subr.bf16.mxu0 0
      %962 = vmatpush1.bf16.msra.mxu0 0
      %963 = vmatprep.subr.bf16.mxu0 0
      %964 = vmatpush1.bf16.msra.mxu0 0
      %965 = vmatprep.subr.bf16.mxu0 0
      %966 = vmatpush1.bf16.msra.mxu0 0
      %967 = vmatprep.subr.bf16.mxu0 0
      %968 = vmatpush1.bf16.msra.mxu0 0
      %969 = vmatprep.subr.bf16.mxu0 0
      %970 = vmatpush1.bf16.msra.mxu0 0
      %971 = vmatprep.subr.bf16.mxu0 0
      %972 = vmatpush1.bf16.msra.mxu0 0
      %973 = vmatprep.subr.bf16.mxu0 0
      %974 = vmatpush1.bf16.msra.mxu0 0
      %975 = vmatprep.subr.bf16.mxu0 0
      %976 = vmatpush1.bf16.msra.mxu0 0
      %977 = vmatprep.mubr.bf16.mxu0 0
      %978 = vmatmul.mubr.bf16.gmra.mrb[0].mxu0 %v391
      %v979 = vpop.f32.mrb[0].mxu0
      %v980 = vadd.f32 %v927, %v979
      %v981 = vpop.f32.mrb[0].mxu0
      %v982 = vadd.f32 %v929, %v981
      %v983 = vpop.f32.mrb[0].mxu0
      %v984 = vadd.f32 %v931, %v983
      %v985 = vpop.f32.mrb[0].mxu0
      %v986 = vadd.f32 %v933, %v985
      %987 = vmatprep.mubr.bf16.mxu0 0
      %988 = vmatmul.mubr.bf16.gmra.mrb[0].mxu0 %v394
      %v989 = vpop.f32.mrb[0].mxu0
      %v990 = vadd.f32 %v937, %v989
      %v991 = vpop.f32.mrb[0].mxu0
      %v992 = vadd.f32 %v939, %v991
      %v993 = vpop.f32.mrb[0].mxu0
      %v994 = vadd.f32 %v941, %v993
      %v995 = vpop.f32.mrb[0].mxu0
      %v996 = vadd.f32 %v943, %v995
      %997 = vdwg.mxu0
      %998 = vmatprep.subr.bf16.mxu0 0
      %999 = vmatpush1.bf16.msra.mxu0 %v750
      %1000 = vmatprep.subr.bf16.mxu0 0
      %1001 = vmatpush1.bf16.msra.mxu0 %v753
      %1002 = vmatprep.subr.bf16.mxu0 0
      %1003 = vmatpush1.bf16.msra.mxu0 %v756
      %1004 = vmatprep.subr.bf16.mxu0 0
      %1005 = vmatpush1.bf16.msra.mxu0 %v759
      %1006 = vmatprep.subr.bf16.mxu0 0
      %1007 = vmatpush1.bf16.msra.mxu0 %v762
      %1008 = vmatprep.subr.bf16.mxu0 0
      %1009 = vmatpush1.bf16.msra.mxu0 %v765
      %1010 = vmatprep.subr.bf16.mxu0 0
      %1011 = vmatpush1.bf16.msra.mxu0 %v768
      %1012 = vmatprep.subr.bf16.mxu0 0
      %1013 = vmatpush1.bf16.msra.mxu0 %v771
      %1014 = vmatprep.subr.bf16.mxu0 0
      %1015 = vmatpush1.bf16.msra.mxu0 %v774
      %1016 = vmatprep.subr.bf16.mxu0 0
      %1017 = vmatpush1.bf16.msra.mxu0 %v777
      %1018 = vmatprep.subr.bf16.mxu0 0
      %1019 = vmatpush1.bf16.msra.mxu0 %v780
      %1020 = vmatprep.subr.bf16.mxu0 0
      %1021 = vmatpush1.bf16.msra.mxu0 %v783
      %1022 = vmatprep.subr.bf16.mxu0 0
      %1023 = vmatpush1.bf16.msra.mxu0 %v786
      %1024 = vmatprep.subr.bf16.mxu0 0
      %1025 = vmatpush1.bf16.msra.mxu0 %v789
      %1026 = vmatprep.subr.bf16.mxu0 0
      %1027 = vmatpush1.bf16.msra.mxu0 %v792
      %1028 = vmatprep.subr.bf16.mxu0 0
      %1029 = vmatpush1.bf16.msra.mxu0 %v795
      %1030 = vmatprep.mubr.bf16.mxu0 %v390
      %1031 = vmatmul.mubr.bf16.gmra.mrb[0].mxu0 %v389
      %v1032 = vpop.f32.mrb[0].mxu0
      %v1033 = vadd.f32 %v504, %v1032
      %v1034 = vpop.f32.mrb[0].mxu0
      %v1035 = vpop.f32.mrb[0].mxu0
      %v1036 = vadd.f32 %v504, %v1035
      %v1037 = vpop.f32.mrb[0].mxu0
      %1038 = vmatprep.mubr.bf16.mxu0 %v393
      %1039 = vmatmul.mubr.bf16.gmra.mrb[0].mxu0 %v392
      %v1040 = vpop.f32.mrb[0].mxu0
      %v1041 = vadd.f32 %v504, %v1040
      %v1042 = vpop.f32.mrb[0].mxu0
      %v1043 = vpop.f32.mrb[0].mxu0
      %v1044 = vadd.f32 %v504, %v1043
      %v1045 = vpop.f32.mrb[0].mxu0
      %1046 = vdwg.mxu0
      %1047 = vmatprep.subr.bf16.mxu0 0
      %1048 = vmatpush1.bf16.msra.mxu0 %v798
      %1049 = vmatprep.subr.bf16.mxu0 0
      %1050 = vmatpush1.bf16.msra.mxu0 %v801
      %1051 = vmatprep.subr.bf16.mxu0 0
      %1052 = vmatpush1.bf16.msra.mxu0 %v804
      %1053 = vmatprep.subr.bf16.mxu0 0
      %1054 = vmatpush1.bf16.msra.mxu0 %v807
      %1055 = vmatprep.subr.bf16.mxu0 0
      %1056 = vmatpush1.bf16.msra.mxu0 %v810
      %1057 = vmatprep.subr.bf16.mxu0 0
      %1058 = vmatpush1.bf16.msra.mxu0 %v813
      %1059 = vmatprep.subr.bf16.mxu0 0
      %1060 = vmatpush1.bf16.msra.mxu0 %v816
      %1061 = vmatprep.subr.bf16.mxu0 0
      %1062 = vmatpush1.bf16.msra.mxu0 %v819
      %1063 = vmatprep.subr.bf16.mxu0 0
      %1064 = vmatpush1.bf16.msra.mxu0 0
      %1065 = vmatprep.subr.bf16.mxu0 0
      %1066 = vmatpush1.bf16.msra.mxu0 0
      %1067 = vmatprep.subr.bf16.mxu0 0
      %1068 = vmatpush1.bf16.msra.mxu0 0
      %1069 = vmatprep.subr.bf16.mxu0 0
      %1070 = vmatpush1.bf16.msra.mxu0 0
      %1071 = vmatprep.subr.bf16.mxu0 0
      %1072 = vmatpush1.bf16.msra.mxu0 0
      %1073 = vmatprep.subr.bf16.mxu0 0
      %1074 = vmatpush1.bf16.msra.mxu0 0
      %1075 = vmatprep.subr.bf16.mxu0 0
      %1076 = vmatpush1.bf16.msra.mxu0 0
      %1077 = vmatprep.subr.bf16.mxu0 0
      %1078 = vmatpush1.bf16.msra.mxu0 0
      %1079 = vmatprep.mubr.bf16.mxu0 0
      %1080 = vmatmul.mubr.bf16.gmra.mrb[0].mxu0 %v391
      %v1081 = vpop.f32.mrb[0].mxu0
      %v1082 = vadd.f32 %v1033, %v1081
      %v1083 = vpop.f32.mrb[0].mxu0
      %v1084 = vpop.f32.mrb[0].mxu0
      %v1085 = vadd.f32 %v1036, %v1084
      %v1086 = vpop.f32.mrb[0].mxu0
      %1087 = vmatprep.mubr.bf16.mxu0 0
      %1088 = vmatmul.mubr.bf16.gmra.mrb[0].mxu0 %v394
      %v1089 = vpop.f32.mrb[0].mxu0
      %v1090 = vadd.f32 %v1041, %v1089
      %v1091 = vpop.f32.mrb[0].mxu0
      %v1092 = vpop.f32.mrb[0].mxu0
      %v1093 = vadd.f32 %v1044, %v1092
      %v1094 = vpop.f32.mrb[0].mxu0
      %1095 = vdwg.mxu0
      %1096 = vst [vmem:[%s231] sm:$0xff] %v980
      %1097 = vst [vmem:[%s231 + $0x8] sm:$0xff] %v982
      %1098 = vst [vmem:[%s231 + $0x10] sm:$0xff] %v1082
      %1099 = vst [vmem:[%s231 + $0x18] sm:$0xff] %v984
      %1100 = vst [vmem:[%s231 + $0x20] sm:$0xff] %v986
      %1101 = vst [vmem:[%s231 + $0x28] sm:$0xff] %v1085
      %1102 = vst [vmem:[%s231 + $0x30] sm:$0xff] %v990
      %1103 = vst [vmem:[%s231 + $0x38] sm:$0xff] %v992
      %1104 = vst [vmem:[%s231 + $0x40] sm:$0xff] %v1090
      %1105 = vst [vmem:[%s231 + $0x48] sm:$0xff] %v994
      %1106 = vst [vmem:[%s231 + $0x50] sm:$0xff] %v996
      %1107 = vst [vmem:[%s231 + $0x58] sm:$0xff] %v1093
      %s1108 = smul.u32 4, %s16
      %p1109 = scmp.lt.s32.totalorder %s1108, 7
      %s1110 = scalar_select %p1109, %s1108, 7
      %s1111 = smul.addr %s1110, 3
      %s1112 = smul.addr %s1111, 8
      %s1113 = scalar_lea.vmem %s5, %s1112
      // Predicated region
      $region41: #{forecast.6} parent=39 // pred_check
        %p1114 = pneg %p144
      $region42: #{forecast.6} parent=39 // pred_check_branch
        %1116 = sbr.rel (%p1114) target = $region44
      $region43: #{forecast.6} parent=39 // pred_region
        %s1117 = smul.u32 4, %s16
      $region44: #{forecast.6} parent=39 // pred_fallthru
        _
    $region40: #{forecast.6} parent=5 // pred_fallthru
      _
    %p1118 = scmp.le.s32.totalorder 2, %s11
    // Predicated region
    $region45: #{forecast.6} parent=5 // pred_check
      %p1119 = pneg %p1118
    $region46: #{forecast.6} parent=5 // pred_check_branch
      %1121 = sbr.rel (%p1119) target = $region48
    $region47: #{forecast.6} parent=5 // pred_region
      %s1122 = ssub.s32 %s11, 2
      // Predicated region
      $region49: #{forecast.6} parent=47 // pred_check
        %p1123 = pneg %p150
      $region50: #{forecast.6} parent=47 // pred_check_branch
        %1125 = sbr.rel (%p1123) target = $region52
      $region51: #{forecast.6} parent=47 // pred_region
        %s1126 = smul.u32 4, %s17
        %p1127 = scmp.lt.s32.totalorder %s1126, 7
        %s1128 = scalar_select %p1127, %s1126, 7
        %s1129 = smul.addr %s1128, 3
        %s1130 = smul.addr %s1129, 8
        %s1131 = scalar_lea.vmem %s5, %s1130
      $region52: #{forecast.6} parent=47 // pred_fallthru
        _
    $region48: #{forecast.6} parent=5 // pred_fallthru
      _
  $region6: #{forecast.6} parent=0 // loop_footer
    %s15 = sadd.s32 1, %s11
  $region7: #{forecast.6} parent=0 // loop_footer_branch
    %10 = sbr.rel target = $region3
  $region8: #{forecast.6} parent=0 // loop_exit
    _

// kernel: forecast.7
$region0: #{forecast.7}
  #allocation0 [shape = 'u32[]', space=smem, size = 0x4, offset = 0x4, fixed_abs, tag = 'smem constant byte address 0x4 - core index']
  #allocation1 [shape = 'u32[144,128]{1,0:T(1,128)}', space=vmem, size = 0x12000, scoped, tag = 'internal scratch']
  #allocation2 [shape = 'f32[8,128]{1,0:T(8,128)}', space=vmem, size = 0x1000, scoped, tag = 'scratch operand']
  %s0 = inlined_call_operand.vmem [shape: f32[8,3072], index: 0, kind: input, shape index: {}, may-alias: {0,1,2}]
  %s1 = inlined_call_operand.vmem [shape: f32[8,3072], index: 1, kind: input, shape index: {}, may-alias: {0,1,2}]
  %s2 = inlined_call_operand.vmem [shape: f32[8,3072], index: 2, kind: input, shape index: {}, may-alias: {0,1,2}]
  %s3 = inlined_call_operand.vmem [shape: bf16[1024,128], index: 3, kind: input, shape index: {}]
  %s4 = inlined_call_operand.vmem [shape: f32[1,128], index: 4, kind: input, shape index: {}]
  %s5 = inlined_call_operand.vmem [shape: f32[8,1], index: 5, kind: input, shape index: {}]
  %s6 = inlined_call_operand.vmem [shape: f32[8,1], index: 6, kind: input, shape index: {}]
  %s7 = inlined_call_operand.hbm [shape: f32[8,128], index: 7, kind: output, shape index: {}]
  %s8 = sld [smem:[#allocation0]]
  $region69: #{forecast.7} parent=0
    _
  %s10 = ssub.s32 1, %s8
  %s11 = scalar_select 0, %s10, %s8
  $region1: #{forecast.7} parent=0
    #allocation3 [shape = 'u8[4096]{0}', space=vmem, size = 0x1000, scoped, tag = 'output window, operand 0, single buffered']
    #allocation4 [shape = 's32[2]{0}', space=sflag, size = 0x8, scoped, tag = 'scoped memory for forecast.7']
    %12 = vsyncpa [#allocation4], 0
    loop: start=0, step=1, limit=4
    $region2: #{forecast.7} parent=1 // loop_pre_header
      _
    $region3: #{forecast.7} parent=1 // loop_header
      %s14 = sphi 0, %s18
      %p15 = scmp.ge.s32.totalorder %s14, 4
      %s21 = sphi 0, %s33
      %s22 = sphi 0, %s29
      %s23 = sphi 0, %s21
      %s24 = sphi 0, %s22
      %s25 = sphi 0, %s23
      %s26 = sphi 0, %s24
      %s38 = sphi 0, %s40
      %s41 = sphi 0, %s38
      %s42 = sphi 0, %s41
      %s58 = sphi 0, %s42
      %s68 = sphi 0, %s70
      %s71 = sphi 0, %s68
      %s72 = sphi 0, %s71
      %s88 = sphi 0, %s72
      %s98 = sphi 0, %s100
      %s101 = sphi 0, %s98
      %s102 = sphi 0, %s101
      %s118 = sphi 0, %s102
      %s124 = sphi 0, %s126
      %s127 = sphi 0, %s124
      %s128 = sphi 0, %s127
      %s144 = sphi 0, %s128
      %s148 = sphi 0, %s148
      %s150 = sphi 0, %s148
      %s151 = sphi 0, %s150
      %s165 = sphi 0, %s151
      %s171 = sphi 0, %s173
      %s174 = sphi 0, %s171
      %s175 = sphi 0, %s174
      %s191 = sphi 0, %s175
      %s197 = sphi 0, %s199
      %s200 = sphi 0, %s197
      %s201 = sphi 0, %s200
      %s217 = sphi 0, %s201
      %s223 = sphi 0, %s225
      %s226 = sphi 0, %s223
      %s227 = sphi 0, %s226
      %s243 = sphi 0, %s227
    $region4: #{forecast.7} parent=1 // loop_header_branch
      %17 = sbr.rel (%p15) target = $region8
    $region5: #{forecast.7} parent=1 // loop_body
      %s19 = ssub.s32 %s14, 1
      %s20 = ssub.s32 %s14, 2
      %s27 = sadd.s32 1, %s22
      %p28 = scmp.ge.s32.totalorder %s27, 2
      %s29 = scalar_select %p28, 0, %s27
      %s30 = sadd.s32 1, %s21
      %s31 = scalar_select %p28, %s30, %s21
      %p32 = scmp.ge.s32.totalorder %s31, 1
      %s33 = scalar_select %p32, 0, %s31
      %s34 = ssub.s32 %s21, %s33
      %s35 = ssub.s32 %s22, %s29
      %s36 = sor.u32 %s34, %s35
      %p37 = scmp.eq.s32.totalorder %s36, 0
      %s39 = sadd.s32 %s38, 1
      %s40 = scalar_select %p37, %s38, %s39
      %p43 = pneg %p37
      %p44 = scmp.eq.s32.totalorder %s14, 1
      %p45 = por %p43, %p44
      %p46 = scmp.ne.s32.totalorder %s38, %s41
      %p47 = scmp.eq.s32.totalorder %s14, 0
      %p48 = por %p46, %p47
      %p49 = scmp.ne.s32.totalorder %s38, %s41
      %p50 = scmp.eq.s32.totalorder %s19, 1
      %p51 = por %p49, %p50
      %p52 = scmp.ne.s32.totalorder %s41, %s42
      %p53 = scmp.eq.s32.totalorder %s19, 0
      %p54 = por %p52, %p53
      %p55 = scmp.ne.s32.totalorder %s41, %s42
      %p56 = scmp.eq.s32.totalorder %s20, 1
      %p57 = por %p55, %p56
      %p59 = scmp.ne.s32.totalorder %s42, %s58
      %p60 = scmp.eq.s32.totalorder %s20, 0
      %p61 = por %p59, %p60
      %s62 = sadd.s32 %s22, 2
      %s63 = sadd.s32 %s29, 2
      %s64 = ssub.s32 %s21, %s33
      %s65 = ssub.s32 %s62, %s63
      %s66 = sor.u32 %s64, %s65
      %p67 = scmp.eq.s32.totalorder %s66, 0
      %s69 = sadd.s32 %s68, 1
      %s70 = scalar_select %p67, %s68, %s69
      %p73 = pneg %p67
      %p74 = scmp.eq.s32.totalorder %s14, 1
      %p75 = por %p73, %p74
      %p76 = scmp.ne.s32.totalorder %s68, %s71
      %p77 = scmp.eq.s32.totalorder %s14, 0
      %p78 = por %p76, %p77
      %p79 = scmp.ne.s32.totalorder %s68, %s71
      %p80 = scmp.eq.s32.totalorder %s19, 1
      %p81 = por %p79, %p80
      %p82 = scmp.ne.s32.totalorder %s71, %s72
      %p83 = scmp.eq.s32.totalorder %s19, 0
      %p84 = por %p82, %p83
      %p85 = scmp.ne.s32.totalorder %s71, %s72
      %p86 = scmp.eq.s32.totalorder %s20, 1
      %p87 = por %p85, %p86
      %p89 = scmp.ne.s32.totalorder %s72, %s88
      %p90 = scmp.eq.s32.totalorder %s20, 0
      %p91 = por %p89, %p90
      %s92 = sadd.s32 %s22, 4
      %s93 = sadd.s32 %s29, 4
      %s94 = ssub.s32 %s21, %s33
      %s95 = ssub.s32 %s92, %s93
      %s96 = sor.u32 %s94, %s95
      %p97 = scmp.eq.s32.totalorder %s96, 0
      %s99 = sadd.s32 %s98, 1
      %s100 = scalar_select %p97, %s98, %s99
      %p103 = pneg %p97
      %p104 = scmp.eq.s32.totalorder %s14, 1
      %p105 = por %p103, %p104
      %p106 = scmp.ne.s32.totalorder %s98, %s101
      %p107 = scmp.eq.s32.totalorder %s14, 0
      %p108 = por %p106, %p107
      %p109 = scmp.ne.s32.totalorder %s98, %s101
      %p110 = scmp.eq.s32.totalorder %s19, 1
      %p111 = por %p109, %p110
      %p112 = scmp.ne.s32.totalorder %s101, %s102
      %p113 = scmp.eq.s32.totalorder %s19, 0
      %p114 = por %p112, %p113
      %p115 = scmp.ne.s32.totalorder %s101, %s102
      %p116 = scmp.eq.s32.totalorder %s20, 1
      %p117 = por %p115, %p116
      %p119 = scmp.ne.s32.totalorder %s102, %s118
      %p120 = scmp.eq.s32.totalorder %s20, 0
      %p121 = por %p119, %p120
      %s122 = ssub.s32 %s22, %s29
      %p123 = scmp.eq.s32.totalorder %s122, 0
      %s125 = sadd.s32 %s124, 1
      %s126 = scalar_select %p123, %s124, %s125
      %p129 = pneg %p123
      %p130 = scmp.eq.s32.totalorder %s14, 1
      %p131 = por %p129, %p130
      %p132 = scmp.ne.s32.totalorder %s124, %s127
      %p133 = scmp.eq.s32.totalorder %s14, 0
      %p134 = por %p132, %p133
      %p135 = scmp.ne.s32.totalorder %s124, %s127
      %p136 = scmp.eq.s32.totalorder %s19, 1
      %p137 = por %p135, %p136
      %p138 = scmp.ne.s32.totalorder %s127, %s128
      %p139 = scmp.eq.s32.totalorder %s19, 0
      %p140 = por %p138, %p139
      %p141 = scmp.ne.s32.totalorder %s127, %s128
      %p142 = scmp.eq.s32.totalorder %s20, 1
      %p143 = por %p141, %p142
      %p145 = scmp.ne.s32.totalorder %s128, %s144
      %p146 = scmp.eq.s32.totalorder %s20, 0
      %p147 = por %p145, %p146
      %s149 = sadd.s32 %s148, 1
      %p152 = scmp.eq.s32.totalorder %s14, 1
      %p153 = scmp.ne.s32.totalorder %s148, %s150
      %p154 = scmp.eq.s32.totalorder %s14, 0
      %p155 = por %p153, %p154
      %p156 = scmp.ne.s32.totalorder %s148, %s150
      %p157 = scmp.eq.s32.totalorder %s19, 1
      %p158 = por %p156, %p157
      %p159 = scmp.ne.s32.totalorder %s150, %s151
      %p160 = scmp.eq.s32.totalorder %s19, 0
      %p161 = por %p159, %p160
      %p162 = scmp.ne.s32.totalorder %s150, %s151
      %p163 = scmp.eq.s32.totalorder %s20, 1
      %p164 = por %p162, %p163
      %p166 = scmp.ne.s32.totalorder %s151, %s165
      %p167 = scmp.eq.s32.totalorder %s20, 0
      %p168 = por %p166, %p167
      %s169 = ssub.s32 %s21, %s33
      %p170 = scmp.eq.s32.totalorder %s169, 0
      %s172 = sadd.s32 %s171, 1
      %s173 = scalar_select %p170, %s171, %s172
      %p176 = pneg %p170
      %p177 = scmp.eq.s32.totalorder %s14, 1
      %p178 = por %p176, %p177
      %p179 = scmp.ne.s32.totalorder %s171, %s174
      %p180 = scmp.eq.s32.totalorder %s14, 0
      %p181 = por %p179, %p180
      %p182 = scmp.ne.s32.totalorder %s171, %s174
      %p183 = scmp.eq.s32.totalorder %s19, 1
      %p184 = por %p182, %p183
      %p185 = scmp.ne.s32.totalorder %s174, %s175
      %p186 = scmp.eq.s32.totalorder %s19, 0
      %p187 = por %p185, %p186
      %p188 = scmp.ne.s32.totalorder %s174, %s175
      %p189 = scmp.eq.s32.totalorder %s20, 1
      %p190 = por %p188, %p189
      %p192 = scmp.ne.s32.totalorder %s175, %s191
      %p193 = scmp.eq.s32.totalorder %s20, 0
      %p194 = por %p192, %p193
      %s195 = ssub.s32 %s21, %s33
      %p196 = scmp.eq.s32.totalorder %s195, 0
      %s198 = sadd.s32 %s197, 1
      %s199 = scalar_select %p196, %s197, %s198
      %p202 = pneg %p196
      %p203 = scmp.eq.s32.totalorder %s14, 1
      %p204 = por %p202, %p203
      %p205 = scmp.ne.s32.totalorder %s197, %s200
      %p206 = scmp.eq.s32.totalorder %s14, 0
      %p207 = por %p205, %p206
      %p208 = scmp.ne.s32.totalorder %s197, %s200
      %p209 = scmp.eq.s32.totalorder %s19, 1
      %p210 = por %p208, %p209
      %p211 = scmp.ne.s32.totalorder %s200, %s201
      %p212 = scmp.eq.s32.totalorder %s19, 0
      %p213 = por %p211, %p212
      %p214 = scmp.ne.s32.totalorder %s200, %s201
      %p215 = scmp.eq.s32.totalorder %s20, 1
      %p216 = por %p214, %p215
      %p218 = scmp.ne.s32.totalorder %s201, %s217
      %p219 = scmp.eq.s32.totalorder %s20, 0
      %p220 = por %p218, %p219
      %s221 = ssub.s32 %s21, %s33
      %p222 = scmp.eq.s32.totalorder %s221, 0
      %s224 = sadd.s32 %s223, 1
      %s225 = scalar_select %p222, %s223, %s224
      %p228 = pneg %p222
      %p229 = scmp.eq.s32.totalorder %s14, 1
      %p230 = por %p228, %p229
      %p231 = scmp.ne.s32.totalorder %s223, %s226
      %p232 = scmp.eq.s32.totalorder %s14, 0
      %p233 = por %p231, %p232
      %p234 = scmp.ne.s32.totalorder %s223, %s226
      %p235 = scmp.eq.s32.totalorder %s19, 1
      %p236 = por %p234, %p235
      %p237 = scmp.ne.s32.totalorder %s226, %s227
      %p238 = scmp.eq.s32.totalorder %s19, 0
      %p239 = por %p237, %p238
      %p240 = scmp.ne.s32.totalorder %s226, %s227
      %p241 = scmp.eq.s32.totalorder %s20, 1
      %p242 = por %p240, %p241
      %p244 = scmp.ne.s32.totalorder %s227, %s243
      %p245 = scmp.eq.s32.totalorder %s20, 0
      %p246 = por %p244, %p245
      %p247 = scmp.le.s32.totalorder 1, %s14
      %p248 = scmp.lt.s32.totalorder %s14, 3
      %p249 = pnand %p247, %p248
      %p250 = pneg %p249
      // Predicated region
      $region9: #{forecast.7} parent=5 // pred_check
        _
      $region10: #{forecast.7} parent=5 // pred_check_branch
        %252 = sbr.rel (%p249) target = $region12
      $region11: #{forecast.7} parent=5 // pred_region
        %s253 = ssub.s32 %s14, 1
        // Predicated region
        $region13: #{forecast.7} parent=11 // pred_check
          %p254 = pneg %p161
        $region14: #{forecast.7} parent=11 // pred_check_branch
          %256 = sbr.rel (%p254) target = $region16
        $region15: #{forecast.7} parent=11 // pred_region
          _
        $region16: #{forecast.7} parent=11 // pred_fallthru
          _
        // Predicated region
        $region17: #{forecast.7} parent=11 // pred_check
          %p257 = pneg %p187
        $region18: #{forecast.7} parent=11 // pred_check_branch
          %259 = sbr.rel (%p257) target = $region20
        $region19: #{forecast.7} parent=11 // pred_region
          %p260 = scmp.lt.s32.totalorder %s23, 0
          %s261 = scalar_select %p260, %s23, 0
          %s262 = smul.addr %s261, 8
          %s263 = scalar_lea.vmem %s5, %s262
        $region20: #{forecast.7} parent=11 // pred_fallthru
          _
        // Predicated region
        $region21: #{forecast.7} parent=11 // pred_check
          %p264 = pneg %p213
        $region22: #{forecast.7} parent=11 // pred_check_branch
          %266 = sbr.rel (%p264) target = $region24
        $region23: #{forecast.7} parent=11 // pred_region
          %p267 = scmp.lt.s32.totalorder %s23, 0
          %s268 = scalar_select %p267, %s23, 0
          %s269 = smul.addr %s268, 8
          %s270 = scalar_lea.vmem %s6, %s269
        $region24: #{forecast.7} parent=11 // pred_fallthru
          _
      $region12: #{forecast.7} parent=5 // pred_fallthru
        _
      %p271 = scmp.lt.s32.totalorder %s14, 2
      // Predicated region
      $region25: #{forecast.7} parent=5 // pred_check
        %p272 = pneg %p271
      $region26: #{forecast.7} parent=5 // pred_check_branch
        %274 = sbr.rel (%p272) target = $region28
      $region27: #{forecast.7} parent=5 // pred_region
        // Predicated region
        $region29: #{forecast.7} parent=27 // pred_check
          %p275 = pneg %p48
        $region30: #{forecast.7} parent=27 // pred_check_branch
          %277 = sbr.rel (%p275) target = $region32
        $region31: #{forecast.7} parent=27 // pred_region
          %s278 = smul.u32 4, %s22
          %p279 = scmp.lt.s32.totalorder %s21, 0
          %s280 = scalar_select %p279, %s21, 0
          %p281 = scmp.lt.s32.totalorder %s278, 23
          %s282 = scalar_select %p281, %s278, 23
          %s283 = smul.addr %s280, 24
          %s284 = sadd.s32 %s282, %s283
          %s285 = smul.addr %s284, 8
          %s286 = scalar_lea.vmem %s0, %s285
          %s287 = smul.u32 4, %s22
        $region32: #{forecast.7} parent=27 // pred_fallthru
          _
        // Predicated region
        $region33: #{forecast.7} parent=27 // pred_check
          %p288 = pneg %p78
        $region34: #{forecast.7} parent=27 // pred_check_branch
          %290 = sbr.rel (%p288) target = $region36
        $region35: #{forecast.7} parent=27 // pred_region
          %s291 = sadd.s32 %s22, 2
          %s292 = smul.u32 4, %s291
          %p293 = scmp.lt.s32.totalorder %s21, 0
          %s294 = scalar_select %p293, %s21, 0
          %p295 = scmp.lt.s32.totalorder %s292, 23
          %s296 = scalar_select %p295, %s292, 23
          %s297 = smul.addr %s294, 24
          %s298 = sadd.s32 %s296, %s297
          %s299 = smul.addr %s298, 8
          %s300 = scalar_lea.vmem %s1, %s299
          %s301 = sadd.s32 %s22, 2
          %s302 = smul.u32 4, %s301
        $region36: #{forecast.7} parent=27 // pred_fallthru
          _
        // Predicated region
        $region37: #{forecast.7} parent=27 // pred_check
          %p303 = pneg %p108
        $region38: #{forecast.7} parent=27 // pred_check_branch
          %305 = sbr.rel (%p303) target = $region40
        $region39: #{forecast.7} parent=27 // pred_region
          %s306 = sadd.s32 %s22, 4
          %s307 = smul.u32 4, %s306
          %p308 = scmp.lt.s32.totalorder %s21, 0
          %s309 = scalar_select %p308, %s21, 0
          %p310 = scmp.lt.s32.totalorder %s307, 23
          %s311 = scalar_select %p310, %s307, 23
          %s312 = smul.addr %s309, 24
          %s313 = sadd.s32 %s311, %s312
          %s314 = smul.addr %s313, 8
          %s315 = scalar_lea.vmem %s2, %s314
          %s316 = sadd.s32 %s22, 4
          %s317 = smul.u32 4, %s316
        $region40: #{forecast.7} parent=27 // pred_fallthru
          _
        // Predicated region
        $region41: #{forecast.7} parent=27 // pred_check
          %p318 = pneg %p134
        $region42: #{forecast.7} parent=27 // pred_check_branch
          %320 = sbr.rel (%p318) target = $region44
        $region43: #{forecast.7} parent=27 // pred_region
          %s321 = smul.u32 64, %s22
          %p322 = scmp.lt.s32.totalorder %s321, 127
          %s323 = scalar_select %p322, %s321, 127
          %s324 = smul.addr %s323, 4
          %s325 = scalar_lea.vmem %s3, %s324
          %s326 = smul.u32 64, %s22
        $region44: #{forecast.7} parent=27 // pred_fallthru
          _
      $region28: #{forecast.7} parent=5 // pred_fallthru
        _
      %p327 = scmp.le.s32.totalorder 1, %s14
      %p328 = scmp.lt.s32.totalorder %s14, 3
      %p329 = pnand %p327, %p328
      %p330 = pneg %p329
      // Predicated region
      $region45: #{forecast.7} parent=5 // pred_check
        _
      $region46: #{forecast.7} parent=5 // pred_check_branch
        %332 = sbr.rel (%p329) target = $region48
      $region47: #{forecast.7} parent=5 // pred_region
        %s333 = ssub.s32 %s14, 1
        %s334 = smul.u32 4, %s24
        %p335 = scmp.lt.s32.totalorder %s23, 0
        %s336 = scalar_select %p335, %s23, 0
        %p337 = scmp.lt.s32.totalorder %s334, 23
        %s338 = scalar_select %p337, %s334, 23
        %s339 = smul.addr %s336, 24
        %s340 = sadd.s32 %s338, %s339
        %s341 = smul.addr %s340, 8
        %s342 = scalar_lea.vmem %s0, %s341
        %p343 = pneg %p54
        %p344 = pneg %p51
        %s345 = sadd.s32 %s24, 2
        %s346 = smul.u32 4, %s345
        %p347 = scmp.lt.s32.totalorder %s23, 0
        %s348 = scalar_select %p347, %s23, 0
        %p349 = scmp.lt.s32.totalorder %s346, 23
        %s350 = scalar_select %p349, %s346, 23
        %s351 = smul.addr %s348, 24
        %s352 = sadd.s32 %s350, %s351
        %s353 = smul.addr %s352, 8
        %s354 = scalar_lea.vmem %s1, %s353
        %p355 = pneg %p84
        %p356 = pneg %p81
        %s357 = sadd.s32 %s24, 4
        %s358 = smul.u32 4, %s357
        %p359 = scmp.lt.s32.totalorder %s23, 0
        %s360 = scalar_select %p359, %s23, 0
        %p361 = scmp.lt.s32.totalorder %s358, 23
        %s362 = scalar_select %p361, %s358, 23
        %s363 = smul.addr %s360, 24
        %s364 = sadd.s32 %s362, %s363
        %s365 = smul.addr %s364, 8
        %s366 = scalar_lea.vmem %s2, %s365
        %p367 = pneg %p114
        %p368 = pneg %p111
        %s369 = smul.u32 64, %s24
        %p370 = scmp.lt.s32.totalorder %s369, 127
        %s371 = scalar_select %p370, %s369, 127
        %s372 = smul.addr %s371, 4
        %s373 = scalar_lea.vmem %s3, %s372
        %p374 = pneg %p140
        %p375 = pneg %p137
        %p376 = pneg %p161
        %p377 = pneg %p158
        %p378 = scmp.lt.s32.totalorder %s23, 0
        %s379 = scalar_select %p378, %s23, 0
        %s380 = smul.addr %s379, 8
        %s381 = scalar_lea.vmem %s5, %s380
        %p382 = pneg %p187
        %p383 = pneg %p184
        %p384 = scmp.lt.s32.totalorder %s23, 0
        %s385 = scalar_select %p384, %s23, 0
        %s386 = smul.addr %s385, 8
        %s387 = scalar_lea.vmem %s6, %s386
        %p388 = pneg %p213
        %p389 = pneg %p210
        %p390 = pneg %p239
        %p391 = pneg %p236
        %s392 = smul.u32 4, %s24
        %p393 = scmp.lt.s32.totalorder %s23, 0
        %s394 = scalar_select %p393, %s23, 0
        %p395 = scmp.lt.s32.totalorder %s392, 23
        %s396 = scalar_select %p395, %s392, 23
        %s397 = smul.addr %s394, 24
        %s398 = sadd.s32 %s396, %s397
        %s399 = smul.addr %s398, 8
        %s400 = scalar_lea.vmem %s0, %s399
        %s401 = smul.u32 4, %s24
        %s402 = sadd.s32 %s24, 2
        %s403 = smul.u32 4, %s402
        %p404 = scmp.lt.s32.totalorder %s23, 0
        %s405 = scalar_select %p404, %s23, 0
        %p406 = scmp.lt.s32.totalorder %s403, 23
        %s407 = scalar_select %p406, %s403, 23
        %s408 = smul.addr %s405, 24
        %s409 = sadd.s32 %s407, %s408
        %s410 = smul.addr %s409, 8
        %s411 = scalar_lea.vmem %s1, %s410
        %s412 = sadd.s32 %s24, 2
        %s413 = smul.u32 4, %s412
        %s414 = sadd.s32 %s24, 4
        %s415 = smul.u32 4, %s414
        %p416 = scmp.lt.s32.totalorder %s23, 0
        %s417 = scalar_select %p416, %s23, 0
        %p418 = scmp.lt.s32.totalorder %s415, 23
        %s419 = scalar_select %p418, %s415, 23
        %s420 = smul.addr %s417, 24
        %s421 = sadd.s32 %s419, %s420
        %s422 = smul.addr %s421, 8
        %s423 = scalar_lea.vmem %s2, %s422
        %s424 = sadd.s32 %s24, 4
        %s425 = smul.u32 4, %s424
        %s426 = smul.u32 64, %s24
        %p427 = scmp.lt.s32.totalorder %s426, 127
        %s428 = scalar_select %p427, %s426, 127
        %s429 = smul.addr %s428, 4
        %s430 = scalar_lea.vmem %s3, %s429
        %s431 = smul.u32 64, %s24
        %p432 = scmp.lt.s32.totalorder %s23, 0
        %s433 = scalar_select %p432, %s23, 0
        %s434 = smul.addr %s433, 8
        %s435 = scalar_lea.vmem %s5, %s434
        %p436 = scmp.lt.s32.totalorder %s23, 0
        %s437 = scalar_select %p436, %s23, 0
        %s438 = smul.addr %s437, 8
        %s439 = scalar_lea.vmem %s6, %s438
        %p441 = scmp.eq.s32.totalorder %s24, 0
        // Predicated region
        $region49: #{forecast.7} parent=47 // pred_check
          %p442 = pneg %p441
        $region50: #{forecast.7} parent=47 // pred_check_branch
          %444 = sbr.rel (%p442) target = $region52
        $region51: #{forecast.7} parent=47 // pred_region
          %445 = vst [vmem:[#allocation2] sm:$0xff] 0.0
        $region52: #{forecast.7} parent=47 // pred_fallthru
          _
        %v446 = vld [vmem:[%s400] sm:$0xff]
        %v447 = vld [vmem:[%s400 + $0x8] sm:$0xff]
        %v448 = vld [vmem:[%s400 + $0x10] sm:$0xff]
        %v449 = vld [vmem:[%s400 + $0x18] sm:$0xff]
        %v450 = vld [vmem:[%s411] sm:$0xff]
        %v451 = vld [vmem:[%s411 + $0x8] sm:$0xff]
        %v452 = vld [vmem:[%s411 + $0x10] sm:$0xff]
        %v453 = vld [vmem:[%s411 + $0x18] sm:$0xff]
        %v454 = vadd.f32 %v446, %v450
        %v455 = vadd.f32 %v447, %v451
        %v456 = vadd.f32 %v448, %v452
        %v457 = vadd.f32 %v449, %v453
        %v458 = vld [vmem:[%s423] sm:$0xff]
        %v459 = vld [vmem:[%s423 + $0x8] sm:$0xff]
        %v460 = vld [vmem:[%s423 + $0x10] sm:$0xff]
        %v461 = vld [vmem:[%s423 + $0x18] sm:$0xff]
        %v462 = vadd.f32 %v454, %v458
        %v463 = vadd.f32 %v455, %v459
        %v464 = vadd.f32 %v456, %v460
        %v465 = vadd.f32 %v457, %v461
        %v466 = vld [vmem:[#allocation2] sm:$0xff]
        %v467 = vpack.c.bf16 %v462, %v462
        %v468 = vpack.c.bf16 %v463, %v463
        %v469 = vpack.c.bf16 %v464, %v464
        %v470 = vpack.c.bf16 %v465, %v465
        %v471 = vld [vmem:[%s430] sm:$0xf]
        %v472 = vld [vmem:[%s430 + $0x4] sm:$0xf]
        %v473 = vld [vmem:[%s430 + $0x8] sm:$0xf]
        %v474 = vld [vmem:[%s430 + $0xc] sm:$0xf]
        %v475 = vld [vmem:[%s430 + $0x10] sm:$0xf]
        %v476 = vld [vmem:[%s430 + $0x14] sm:$0xf]
        %v477 = vld [vmem:[%s430 + $0x18] sm:$0xf]
        %v478 = vld [vmem:[%s430 + $0x1c] sm:$0xf]
        %v479 = vld [vmem:[%s430 + $0x20] sm:$0xf]
        %v480 = vld [vmem:[%s430 + $0x24] sm:$0xf]
        %v481 = vld [vmem:[%s430 + $0x28] sm:$0xf]
        %v482 = vld [vmem:[%s430 + $0x2c] sm:$0xf]
        %v483 = vld [vmem:[%s430 + $0x30] sm:$0xf]
        %v484 = vld [vmem:[%s430 + $0x34] sm:$0xf]
        %v485 = vld [vmem:[%s430 + $0x38] sm:$0xf]
        %v486 = vld [vmem:[%s430 + $0x3c] sm:$0xf]
        %v487 = vld [vmem:[%s430 + $0x40] sm:$0xf]
        %v488 = vld [vmem:[%s430 + $0x44] sm:$0xf]
        %v489 = vld [vmem:[%s430 + $0x48] sm:$0xf]
        %v490 = vld [vmem:[%s430 + $0x4c] sm:$0xf]
        %v491 = vld [vmem:[%s430 + $0x50] sm:$0xf]
        %v492 = vld [vmem:[%s430 + $0x54] sm:$0xf]
        %v493 = vld [vmem:[%s430 + $0x58] sm:$0xf]
        %v494 = vld [vmem:[%s430 + $0x5c] sm:$0xf]
        %v495 = vld [vmem:[%s430 + $0x60] sm:$0xf]
        %v496 = vld [vmem:[%s430 + $0x64] sm:$0xf]
        %v497 = vld [vmem:[%s430 + $0x68] sm:$0xf]
        %v498 = vld [vmem:[%s430 + $0x6c] sm:$0xf]
        %v499 = vld [vmem:[%s430 + $0x70] sm:$0xf]
        %v500 = vld [vmem:[%s430 + $0x74] sm:$0xf]
        %v501 = vld [vmem:[%s430 + $0x78] sm:$0xf]
        %v502 = vld [vmem:[%s430 + $0x7c] sm:$0xf]
        %v503 = vld [vmem:[%s430 + $0x80] sm:$0xf]
        %v504 = vld [vmem:[%s430 + $0x84] sm:$0xf]
        %v505 = vld [vmem:[%s430 + $0x88] sm:$0xf]
        %v506 = vld [vmem:[%s430 + $0x8c] sm:$0xf]
        %v507 = vld [vmem:[%s430 + $0x90] sm:$0xf]
        %v508 = vld [vmem:[%s430 + $0x94] sm:$0xf]
        %v509 = vld [vmem:[%s430 + $0x98] sm:$0xf]
        %v510 = vld [vmem:[%s430 + $0x9c] sm:$0xf]
        %v511 = vld [vmem:[%s430 + $0xa0] sm:$0xf]
        %v512 = vld [vmem:[%s430 + $0xa4] sm:$0xf]
        %v513 = vld [vmem:[%s430 + $0xa8] sm:$0xf]
        %v514 = vld [vmem:[%s430 + $0xac] sm:$0xf]
        %v515 = vld [vmem:[%s430 + $0xb0] sm:$0xf]
        %v516 = vld [vmem:[%s430 + $0xb4] sm:$0xf]
        %v517 = vld [vmem:[%s430 + $0xb8] sm:$0xf]
        %v518 = vld [vmem:[%s430 + $0xbc] sm:$0xf]
        %v519 = vld [vmem:[%s430 + $0xc0] sm:$0xf]
        %v520 = vld [vmem:[%s430 + $0xc4] sm:$0xf]
        %v521 = vld [vmem:[%s430 + $0xc8] sm:$0xf]
        %v522 = vld [vmem:[%s430 + $0xcc] sm:$0xf]
        %v523 = vld [vmem:[%s430 + $0xd0] sm:$0xf]
        %v524 = vld [vmem:[%s430 + $0xd4] sm:$0xf]
        %v525 = vld [vmem:[%s430 + $0xd8] sm:$0xf]
        %v526 = vld [vmem:[%s430 + $0xdc] sm:$0xf]
        %v527 = vld [vmem:[%s430 + $0xe0] sm:$0xf]
        %v528 = vld [vmem:[%s430 + $0xe4] sm:$0xf]
        %v529 = vld [vmem:[%s430 + $0xe8] sm:$0xf]
        %v530 = vld [vmem:[%s430 + $0xec] sm:$0xf]
        %v531 = vld [vmem:[%s430 + $0xf0] sm:$0xf]
        %v532 = vld [vmem:[%s430 + $0xf4] sm:$0xf]
        %v533 = vld [vmem:[%s430 + $0xf8] sm:$0xf]
        %v534 = vld [vmem:[%s430 + $0xfc] sm:$0xf]
        %v599 = vunpack.c.l.b16 %v471
        %v600 = vunpack.c.l.b16 %v472
        %v601 = vunpack.c.l.b16 %v473
        %v602 = vunpack.c.l.b16 %v474
        %v603 = vunpack.c.l.b16 %v475
        %v604 = vunpack.c.l.b16 %v476
        %v605 = vunpack.c.l.b16 %v477
        %v606 = vunpack.c.l.b16 %v478
        %v607 = vunpack.c.l.b16 %v479
        %v608 = vunpack.c.l.b16 %v480
        %v609 = vunpack.c.l.b16 %v481
        %v610 = vunpack.c.l.b16 %v482
        %v611 = vunpack.c.l.b16 %v483
        %v612 = vunpack.c.l.b16 %v484
        %v613 = vunpack.c.l.b16 %v485
        %v614 = vunpack.c.l.b16 %v486
        %v615 = vunpack.c.l.b16 %v487
        %v616 = vunpack.c.l.b16 %v488
        %v617 = vunpack.c.l.b16 %v489
        %v618 = vunpack.c.l.b16 %v490
        %v619 = vunpack.c.l.b16 %v491
        %v620 = vunpack.c.l.b16 %v492
        %v621 = vunpack.c.l.b16 %v493
        %v622 = vunpack.c.l.b16 %v494
        %v623 = vunpack.c.l.b16 %v495
        %v624 = vunpack.c.l.b16 %v496
        %v625 = vunpack.c.l.b16 %v497
        %v626 = vunpack.c.l.b16 %v498
        %v627 = vunpack.c.l.b16 %v499
        %v628 = vunpack.c.l.b16 %v500
        %v629 = vunpack.c.l.b16 %v501
        %v630 = vunpack.c.l.b16 %v502
        %v631 = vunpack.c.l.b16 %v503
        %v632 = vunpack.c.l.b16 %v504
        %v633 = vunpack.c.l.b16 %v505
        %v634 = vunpack.c.l.b16 %v506
        %v635 = vunpack.c.l.b16 %v507
        %v636 = vunpack.c.l.b16 %v508
        %v637 = vunpack.c.l.b16 %v509
        %v638 = vunpack.c.l.b16 %v510
        %v639 = vunpack.c.l.b16 %v511
        %v640 = vunpack.c.l.b16 %v512
        %v641 = vunpack.c.l.b16 %v513
        %v642 = vunpack.c.l.b16 %v514
        %v643 = vunpack.c.l.b16 %v515
        %v644 = vunpack.c.l.b16 %v516
        %v645 = vunpack.c.l.b16 %v517
        %v646 = vunpack.c.l.b16 %v518
        %v647 = vunpack.c.l.b16 %v519
        %v648 = vunpack.c.l.b16 %v520
        %v649 = vunpack.c.l.b16 %v521
        %v650 = vunpack.c.l.b16 %v522
        %v651 = vunpack.c.l.b16 %v523
        %v652 = vunpack.c.l.b16 %v524
        %v653 = vunpack.c.l.b16 %v525
        %v654 = vunpack.c.l.b16 %v526
        %v655 = vunpack.c.l.b16 %v527
        %v656 = vunpack.c.l.b16 %v528
        %v657 = vunpack.c.l.b16 %v529
        %v658 = vunpack.c.l.b16 %v530
        %v659 = vunpack.c.l.b16 %v531
        %v660 = vunpack.c.l.b16 %v532
        %v661 = vunpack.c.l.b16 %v533
        %v662 = vunpack.c.l.b16 %v534
        %v663 = vpack.c.b16 %v600, %v599
        %v664 = vpack.c.b16 %v602, %v601
        %v665 = vpack.c.b16 %v604, %v603
        %v666 = vpack.c.b16 %v606, %v605
        %v667 = vpack.c.b16 %v608, %v607
        %v668 = vpack.c.b16 %v610, %v609
        %v669 = vpack.c.b16 %v612, %v611
        %v670 = vpack.c.b16 %v614, %v613
        %v671 = vpack.c.b16 %v616, %v615
        %v672 = vpack.c.b16 %v618, %v617
        %v673 = vpack.c.b16 %v620, %v619
        %v674 = vpack.c.b16 %v622, %v621
        %v675 = vpack.c.b16 %v624, %v623
        %v676 = vpack.c.b16 %v626, %v625
        %v677 = vpack.c.b16 %v628, %v627
        %v678 = vpack.c.b16 %v630, %v629
        %v679 = vpack.c.b16 %v632, %v631
        %v680 = vpack.c.b16 %v634, %v633
        %v681 = vpack.c.b16 %v636, %v635
        %v682 = vpack.c.b16 %v638, %v637
        %v683 = vpack.c.b16 %v640, %v639
        %v684 = vpack.c.b16 %v642, %v641
        %v685 = vpack.c.b16 %v644, %v643
        %v686 = vpack.c.b16 %v646, %v645
        %v687 = vpack.c.b16 %v648, %v647
        %v688 = vpack.c.b16 %v650, %v649
        %v689 = vpack.c.b16 %v652, %v651
        %v690 = vpack.c.b16 %v654, %v653
        %v691 = vpack.c.b16 %v656, %v655
        %v692 = vpack.c.b16 %v658, %v657
        %v693 = vpack.c.b16 %v660, %v659
        %v694 = vpack.c.b16 %v662, %v661
        %727 = vmatprep.subr.bf16.mxu0 0
        %728 = vmatpush1.bf16.msra.mxu0 %v663
        %729 = vmatprep.subr.bf16.mxu0 0
        %730 = vmatpush1.bf16.msra.mxu0 %v664
        %731 = vmatprep.subr.bf16.mxu0 0
        %732 = vmatpush1.bf16.msra.mxu0 %v665
        %733 = vmatprep.subr.bf16.mxu0 0
        %734 = vmatpush1.bf16.msra.mxu0 %v666
        %735 = vmatprep.subr.bf16.mxu0 0
        %736 = vmatpush1.bf16.msra.mxu0 %v667
        %737 = vmatprep.subr.bf16.mxu0 0
        %738 = vmatpush1.bf16.msra.mxu0 %v668
        %739 = vmatprep.subr.bf16.mxu0 0
        %740 = vmatpush1.bf16.msra.mxu0 %v669
        %741 = vmatprep.subr.bf16.mxu0 0
        %742 = vmatpush1.bf16.msra.mxu0 %v670
        %743 = vmatprep.subr.bf16.mxu0 0
        %744 = vmatpush1.bf16.msra.mxu0 %v671
        %745 = vmatprep.subr.bf16.mxu0 0
        %746 = vmatpush1.bf16.msra.mxu0 %v672
        %747 = vmatprep.subr.bf16.mxu0 0
        %748 = vmatpush1.bf16.msra.mxu0 %v673
        %749 = vmatprep.subr.bf16.mxu0 0
        %750 = vmatpush1.bf16.msra.mxu0 %v674
        %751 = vmatprep.subr.bf16.mxu0 0
        %752 = vmatpush1.bf16.msra.mxu0 %v675
        %753 = vmatprep.subr.bf16.mxu0 0
        %754 = vmatpush1.bf16.msra.mxu0 %v676
        %755 = vmatprep.subr.bf16.mxu0 0
        %756 = vmatpush1.bf16.msra.mxu0 %v677
        %757 = vmatprep.subr.bf16.mxu0 0
        %758 = vmatpush1.bf16.msra.mxu0 %v678
        %759 = vmatprep.mubr.bf16.mxu0 %v468
        %760 = vmatmul.mubr.bf16.gmra.mrb[0].mxu0 %v467
        %v761 = vpop.f32.mrb[0].mxu0
        %v762 = vadd.f32 0.0, %v761
        %v763 = vpop.f32.mrb[0].mxu0
        %v764 = vpop.f32.mrb[0].mxu0
        %v765 = vpop.f32.mrb[0].mxu0
        %766 = vdwg.mxu0
        %767 = vmatprep.subr.bf16.mxu0 0
        %768 = vmatpush1.bf16.msra.mxu0 %v679
        %769 = vmatprep.subr.bf16.mxu0 0
        %770 = vmatpush1.bf16.msra.mxu0 %v680
        %771 = vmatprep.subr.bf16.mxu0 0
        %772 = vmatpush1.bf16.msra.mxu0 %v681
        %773 = vmatprep.subr.bf16.mxu0 0
        %774 = vmatpush1.bf16.msra.mxu0 %v682
        %775 = vmatprep.subr.bf16.mxu0 0
        %776 = vmatpush1.bf16.msra.mxu0 %v683
        %777 = vmatprep.subr.bf16.mxu0 0
        %778 = vmatpush1.bf16.msra.mxu0 %v684
        %779 = vmatprep.subr.bf16.mxu0 0
        %780 = vmatpush1.bf16.msra.mxu0 %v685
        %781 = vmatprep.subr.bf16.mxu0 0
        %782 = vmatpush1.bf16.msra.mxu0 %v686
        %783 = vmatprep.subr.bf16.mxu0 0
        %784 = vmatpush1.bf16.msra.mxu0 %v687
        %785 = vmatprep.subr.bf16.mxu0 0
        %786 = vmatpush1.bf16.msra.mxu0 %v688
        %787 = vmatprep.subr.bf16.mxu0 0
        %788 = vmatpush1.bf16.msra.mxu0 %v689
        %789 = vmatprep.subr.bf16.mxu0 0
        %790 = vmatpush1.bf16.msra.mxu0 %v690
        %791 = vmatprep.subr.bf16.mxu0 0
        %792 = vmatpush1.bf16.msra.mxu0 %v691
        %793 = vmatprep.subr.bf16.mxu0 0
        %794 = vmatpush1.bf16.msra.mxu0 %v692
        %795 = vmatprep.subr.bf16.mxu0 0
        %796 = vmatpush1.bf16.msra.mxu0 %v693
        %797 = vmatprep.subr.bf16.mxu0 0
        %798 = vmatpush1.bf16.msra.mxu0 %v694
        %799 = vmatprep.mubr.bf16.mxu0 %v470
        %800 = vmatmul.mubr.bf16.gmra.mrb[0].mxu0 %v469
        %v801 = vpop.f32.mrb[0].mxu0
        %v802 = vadd.f32 %v762, %v801
        %v803 = vpop.f32.mrb[0].mxu0
        %v804 = vpop.f32.mrb[0].mxu0
        %v805 = vpop.f32.mrb[0].mxu0
        %806 = vdwg.mxu0
        %v807 = vadd.f32 %v466, %v802
        %808 = vst [vmem:[#allocation2] sm:$0xff] %v807
        %p809 = scmp.eq.s32.totalorder %s24, 1
        // Predicated region
        $region53: #{forecast.7} parent=47 // pred_check
          %p810 = pneg %p809
        $region54: #{forecast.7} parent=47 // pred_check_branch
          %812 = sbr.rel (%p810) target = $region56
        $region55: #{forecast.7} parent=47 // pred_region
          %v813 = vld [vmem:[#allocation2] sm:$0xff]
          %v814 = vld [vmem:[%s4] sm:$0x1]
          %v815 = vmul.f32 %v814, 3.0
          %v817 = vlaneseq
          %v818 = vshrl.u32 %v817, 7
          %v819 = vsub.s32 0, %v818
          %v820 = vrot.slane %v815, %v819
          %v822 = vadd.f32 %v813, %v820
          %v823 = vld [vmem:[%s435] sm:$0xff]
          %825 = vset.pattern.permute.xlu0 0
          %826 = vperm.xlu0 %825, %v823
          %v827 = vpop.permute.xlu0 %826
          %v829 = vmul.f32 %v822, %v827
          %v830 = vld [vmem:[%s439] sm:$0xff]
          %832 = vset.pattern.permute.xlu0 0
          %833 = vperm.xlu0 %832, %v830
          %v834 = vpop.permute.xlu0 %833
          %v836 = vadd.f32 %v829, %v834
          %837 = vst [vmem:[#allocation3] sm:$0xff] %v836
        $region56: #{forecast.7} parent=47 // pred_fallthru
          _
        // Predicated region
        $region57: #{forecast.7} parent=47 // pred_check
          %p838 = pneg %p236
        $region58: #{forecast.7} parent=47 // pred_check_branch
          %840 = sbr.rel (%p838) target = $region60
        $region59: #{forecast.7} parent=47 // pred_region
          %s842 = ssub.s32 128, 128
          %843 = vsyncadd [#allocation4], %s842
          %s844 = smul.addr %s23, 128
          %s845 = scalar_lea.hbm %s7, %s844
          %s847 = sshll.u32 [#allocation3], 4
          %s848 = int_to_ptr.vmem [resolvable:$true] %s847
          %850 = dma.vmem_to_hbm [thread:$0]  %s848, 128, %s845, [#allocation4]
        $region60: #{forecast.7} parent=47 // pred_fallthru
          _
        // Predicated region
        $region61: #{forecast.7} parent=47 // pred_check
          %p851 = pneg %p236
        $region62: #{forecast.7} parent=47 // pred_check_branch
          %853 = sbr.rel (%p851) target = $region64
        $region63: #{forecast.7} parent=47 // pred_region
          %854 = dma.done [#allocation4], 128
        $region64: #{forecast.7} parent=47 // pred_fallthru
          _
      $region48: #{forecast.7} parent=5 // pred_fallthru
        _
      %p855 = scmp.le.s32.totalorder 2, %s14
      // Predicated region
      $region65: #{forecast.7} parent=5 // pred_check
        %p856 = pneg %p855
      $region66: #{forecast.7} parent=5 // pred_check_branch
        %858 = sbr.rel (%p856) target = $region68
      $region67: #{forecast.7} parent=5 // pred_region
        %s859 = ssub.s32 %s14, 2
      $region68: #{forecast.7} parent=5 // pred_fallthru
        _
    $region6: #{forecast.7} parent=1 // loop_footer
      %s18 = sadd.s32 1, %s14
    $region7: #{forecast.7} parent=1 // loop_footer_branch
      %13 = sbr.rel target = $region3
    $region8: #{forecast.7} parent=1 // loop_exit
      _
    %860 = vsyncpa [#allocation4], 1
    %s861 = scalar_lea.sflag [#allocation4], 1
    %862 = vsyncpa %s861, 1

</llo_original>
